<compile_context>
chip_gen: v5e
topology: v5e:2x2
jax: 0.10.0
libtpu: 0.0.40
codegen_flags: <defaults>
</compile_context>

<pallas_src>
import functools
import math

import jax
import jax.numpy as jnp
from jax.experimental import pallas as pl
from jax.experimental.pallas import tpu as pltpu


# ----------------------------- Pallas kernel -------------------------------

def _layer_norm_f32(x, w, b, eps=1e-5):
    # fp32 LayerNorm (matches the fp16-safe LayerNorm subclass).
    xf = x.astype(jnp.float32)
    mu = jnp.mean(xf, axis=-1, keepdims=True)
    var = jnp.mean((xf - mu) ** 2, axis=-1, keepdims=True)
    y = (xf - mu) * jax.lax.rsqrt(var + eps)
    return y * w + b


def _transformer_kernel(n_head,
                        x_ref, mask_ref,
                        ln1_w_ref, ln1_b_ref,
                        wqkv_ref, bqkv_ref, wo_h_ref, bo_ref,
                        ln2_w_ref, ln2_b_ref,
                        wfc_ref, bfc_ref, wproj_ref, bproj_ref,
                        out_ref):
    """Grid = (batch_block, layer).  out_ref holds the residual stream and is
    revisited (stays VMEM-resident) across the layer axis; x_ref only seeds it."""
    layer = pl.program_id(1)

    @pl.when(layer == 0)
    def _():
        out_ref[...] = x_ref[...]

    BB, L, D = x_ref.shape
    H = n_head
    Dh = D // H
    n = BB * L

    x = out_ref[...].reshape(n, D).astype(jnp.float32)       # residual stream (f32)
    mask = mask_ref[...].astype(jnp.float32)                  # (BB, L, L)

    # ---- attention branch: x + out_proj(MHA(ln_1(x))) ----
    h = _layer_norm_f32(x, ln1_w_ref[0], ln1_b_ref[0])
    # Single big QKV matmul over all BB*L rows (bf16 MXU, f32 accumulate).
    # 1/sqrt(Dh) is already folded into the Q columns of wqkv/bqkv.
    qkv = jnp.dot(h.astype(jnp.bfloat16), wqkv_ref[0],
                  preferred_element_type=jnp.float32) + bqkv_ref[0]   # (n, 3D) f32

    # Rearrange to head-major without per-head lane slicing:
    #   (n, 3D) -T-> (3D, n) -> row slices -> (H, Dh, n)  [tile-aligned sublane split]
    qkv_t = qkv.T
    q_fm = qkv_t[0 * D:1 * D].reshape(H, Dh, n)
    k_fm = qkv_t[1 * D:2 * D].reshape(H, Dh, n)
    v_fm = qkv_t[2 * D:3 * D].reshape(H, Dh, n)
    q_lm = jnp.swapaxes(q_fm, 1, 2)                           # (H, n, Dh)

    wo_heads = wo_h_ref[0]                                    # (H, Dh, D) bf16

    outs = []
    for b in range(BB):                                       # static, BB is small
        sl = slice(b * L, (b + 1) * L)
        qb = q_lm[:, sl, :].astype(jnp.bfloat16)              # (H, L, Dh)
        kb = k_fm[:, :, sl].astype(jnp.bfloat16)              # (H, Dh, L)
        vb = v_fm[:, :, sl].astype(jnp.bfloat16)              # (H, Dh, L)

        # Batched-over-heads scores (MXU), mask shared across heads, f32 softmax.
        s = jnp.einsum('hld,hdm->hlm', qb, kb,
                       preferred_element_type=jnp.float32)    # (H, L, L)
        s = s + mask[b][None, :, :]
        s = s - jnp.max(s, axis=-1, keepdims=True)
        p = jnp.exp(s)
        p = p * pl.reciprocal(jnp.sum(p, axis=-1, keepdims=True), approx=True)

        o = jnp.einsum('hlm,hem->hle', p.astype(jnp.bfloat16), vb,
                       preferred_element_type=jnp.float32)    # (H, L, Dh)
        # Output projection folded per head: sum_h O_h @ Wo_h  (no head concat).
        po = jnp.einsum('hld,hde->hle', o.astype(jnp.bfloat16), wo_heads,
                        preferred_element_type=jnp.float32)   # (H, L, D)
        outs.append(jnp.sum(po, axis=0))                      # (L, D)

    attn = outs[0] if BB == 1 else jnp.concatenate(outs, axis=0)   # (n, D)
    attn = attn + bo_ref[0]
    x = x + attn

    # ---- MLP branch: x + c_proj(QuickGELU(c_fc(ln_2(x)))) ----
    h2 = _layer_norm_f32(x, ln2_w_ref[0], ln2_b_ref[0])
    ff = jnp.dot(h2.astype(jnp.bfloat16), wfc_ref[0],
                 preferred_element_type=jnp.float32) + bfc_ref[0]
    ff = ff * jax.nn.sigmoid(1.702 * ff)                      # QuickGELU (f32)
    ff = jnp.dot(ff.astype(jnp.bfloat16), wproj_ref[0],
                 preferred_element_type=jnp.float32) + bproj_ref[0]
    x = x + ff

    out_ref[...] = x.reshape(BB, L, D).astype(out_ref.dtype)


# ------------------------------ JAX wrapper --------------------------------

_PARAM_ORDER = ("ln1_w", "ln1_b", "wqkv", "bqkv", "wo_h", "bo",
                "ln2_w", "ln2_b", "wfc", "bfc", "wproj", "bproj")
_BF16 = jnp.bfloat16


def _pick_batch_block(n_batch, seq_len, max_rows=512):
    """Largest divisor of n_batch keeping BB*L matmul rows <= max_rows."""
    bb = 1
    for cand in range(1, n_batch + 1):
        if n_batch % cand == 0 and cand * seq_len <= max_rows:
            bb = cand
    return bb


def prepare_stacked_params(layer_params, n_head):
    """Stack per-layer params along a leading layer axis, pre-arranged for the kernel:
       bf16 (in,out) matmul weights, 1/sqrt(Dh) folded into Q, per-head out-proj,
       f32 LayerNorm params and biases."""
    D = layer_params[0]["wqkv"].shape[0]
    Dh = D // n_head
    scale = 1.0 / math.sqrt(Dh)
    qscale = jnp.concatenate([jnp.full((D,), scale, jnp.float32),
                              jnp.ones((2 * D,), jnp.float32)])

    def prep(p):
        return dict(
            ln1_w=p["ln1_w"].astype(jnp.float32),
            ln1_b=p["ln1_b"].astype(jnp.float32),
            wqkv=(p["wqkv"] * qscale[None, :]).astype(_BF16),
            bqkv=(p["bqkv"] * qscale[None, :]).astype(jnp.float32),
            wo_h=p["wo"].reshape(n_head, Dh, D).astype(_BF16),
            bo=p["bo"].astype(jnp.float32),
            ln2_w=p["ln2_w"].astype(jnp.float32),
            ln2_b=p["ln2_b"].astype(jnp.float32),
            wfc=p["wfc"].astype(_BF16),
            bfc=p["bfc"].astype(jnp.float32),
            wproj=p["wproj"].astype(_BF16),
            bproj=p["bproj"].astype(jnp.float32),
        )

    preps = [prep(p) for p in layer_params]
    return {k: jnp.stack([q[k] for q in preps], axis=0) for k in preps[0]}


def transformer_pallas(x_nld, attn_mask, stacked, n_head):
    N, L, D = x_nld.shape
    n_layers = stacked["wqkv"].shape[0]
    BB = _pick_batch_block(N, L)
    weights = [stacked[k] for k in _PARAM_ORDER]

    def _layer_spec(arr):
        zeros = (0,) * (arr.ndim - 1)
        # Weight blocks vary with the (inner) layer axis -> BlockSpec pipeline
        # prefetches next layer's weights while the current layer computes.
        return pl.BlockSpec((1,) + arr.shape[1:], lambda b, l: (l,) + zeros)

    in_specs = [
        pl.BlockSpec((BB, L, D), lambda b, l: (b, 0, 0)),   # x: resident across layers
        pl.BlockSpec((BB, L, L), lambda b, l: (b, 0, 0)),   # mask: resident across layers
    ] + [_layer_spec(w) for w in weights]

    kernel = functools.partial(_transformer_kernel, n_head)

    return pl.pallas_call(
        kernel,
        out_shape=jax.ShapeDtypeStruct((N, L, D), x_nld.dtype),
        grid_spec=pltpu.PrefetchScalarGridSpec(
            num_scalar_prefetch=0,
            grid=(N // BB, n_layers),           # layer axis last (sequential)
            in_specs=in_specs,
            out_specs=pl.BlockSpec((BB, L, D), lambda b, l: (b, 0, 0)),
        ),
        compiler_params=pltpu.CompilerParams(
            dimension_semantics=("parallel", "arbitrary"),
            # Only one layer's bf16 weights (double-buffered) live in VMEM at a time;
            # 48 MiB is safe on v5e/v6e (128 MiB) and within v7x's 64 MiB.
            vmem_limit_bytes=48 * 1024 * 1024,
        ),
    )(x_nld, attn_mask, *weights)


def transformer_forward(x_lnd, attn_mask, layer_params, n_head):
    """Matches Transformer.forward: x (L, N, D), attn_mask (N, L, L) -> (L, N, D)."""
    stacked = prepare_stacked_params(layer_params, n_head)
    x = jnp.transpose(x_lnd, (1, 0, 2))            # (N, L, D) for the kernel
    y = transformer_pallas(x, attn_mask, stacked, n_head)
    return jnp.transpose(y, (1, 0, 2))


# ------------------------- deterministic parameters ------------------------

def init_layer_params(key, D):
    ks = jax.random.split(key, 8)
    std = 0.02
    f32 = jnp.float32
    # Linear weights stored pre-transposed to (in, out) so the math is x @ W.
    return dict(
        ln1_w=jnp.ones((1, D), f32),
        ln1_b=jnp.zeros((1, D), f32),
        wqkv=jax.random.normal(ks[0], (D, 3 * D), f32) * std,
        bqkv=jax.random.normal(ks[1], (1, 3 * D), f32) * std,
        wo=jax.random.normal(ks[2], (D, D), f32) * std,
        bo=jax.random.normal(ks[3], (1, D), f32) * std,
        ln2_w=jnp.ones((1, D), f32),
        ln2_b=jnp.zeros((1, D), f32),
        wfc=jax.random.normal(ks[4], (D, 4 * D), f32) * std,
        bfc=jax.random.normal(ks[5], (1, 4 * D), f32) * std,
        wproj=jax.random.normal(ks[6], (4 * D, D), f32) * std,
        bproj=jax.random.normal(ks[7], (1, D), f32) * std,
    )


# ----------------------------- pure-JAX reference --------------------------

def transformer_ref(x_lnd, mask, layer_params, n_head):
    x = jnp.transpose(x_lnd, (1, 0, 2))            # (N, L, D)
    N, L, D = x.shape
    H, Dh = n_head, D // n_head

    def ln(t, w, b):
        mu = t.mean(-1, keepdims=True)
        var = ((t - mu) ** 2).mean(-1, keepdims=True)
        return (t - mu) * jax.lax.rsqrt(var + 1e-5) * w[0] + b[0]

    for p in layer_params:
        h = ln(x, p["ln1_w"], p["ln1_b"])
        qkv = h @ p["wqkv"] + p["bqkv"][0]
        q, k, v = qkv[..., :D], qkv[..., D:2 * D], qkv[..., 2 * D:]
        q = q.reshape(N, L, H, Dh)
        k = k.reshape(N, L, H, Dh)
        v = v.reshape(N, L, H, Dh)
        s = jnp.einsum("nlhd,nmhd->nhlm", q, k) / math.sqrt(Dh) + mask[:, None]
        a = jax.nn.softmax(s, axis=-1)
        o = jnp.einsum("nhlm,nmhd->nlhd", a, v).reshape(N, L, D)
        x = x + (o @ p["wo"] + p["bo"][0])
        h2 = ln(x, p["ln2_w"], p["ln2_b"])
        ff = h2 @ p["wfc"] + p["bfc"][0]
        ff = ff * jax.nn.sigmoid(1.702 * ff)
        x = x + (ff @ p["wproj"] + p["bproj"][0])
    return jnp.transpose(x, (1, 0, 2))


# ----------------------------------- main -----------------------------------

if __name__ == "__main__":
    width, layers, heads = 32, 2, 4
    L, N = 8, 2

    key = jax.random.PRNGKey(0)
    k_x, k_m, k_p = jax.random.split(key, 3)

    x = jax.random.normal(k_x, (L, N, width), jnp.float32)            # (L, N, D)
    attn_mask = jax.random.normal(k_m, (N, L, L), jnp.float32) * 0.1  # additive mask

    layer_keys = jax.random.split(k_p, layers)
    layer_params = [init_layer_params(layer_keys[i], width) for i in range(layers)]

    out = jax.block_until_ready(transformer_forward(x, attn_mask, layer_params, heads))
    ref = jax.block_until_ready(transformer_ref(x, attn_mask, layer_params, heads))

    max_err = float(jnp.max(jnp.abs(out - ref)))
    assert out.shape == (L, N, width)
    assert max_err < 1e-2, f"mismatch vs reference: {max_err}"

    print("KERNEL_OK")
</pallas_src>

<mosaic_0001>
module attributes {stable_mosaic.version = 11 : i64} {
  func.func @_transformer_kernel(%arg0: i32, %arg1: i32, %arg2: memref<2x8x32xf32, #tpu.memory_space<vmem>>, %arg3: memref<2x8x8xf32, #tpu.memory_space<vmem>>, %arg4: memref<1x1x32xf32, #tpu.memory_space<vmem>>, %arg5: memref<1x1x32xf32, #tpu.memory_space<vmem>>, %arg6: memref<1x32x96xbf16, #tpu.memory_space<vmem>>, %arg7: memref<1x1x96xf32, #tpu.memory_space<vmem>>, %arg8: memref<1x4x8x32xbf16, #tpu.memory_space<vmem>>, %arg9: memref<1x1x32xf32, #tpu.memory_space<vmem>>, %arg10: memref<1x1x32xf32, #tpu.memory_space<vmem>>, %arg11: memref<1x1x32xf32, #tpu.memory_space<vmem>>, %arg12: memref<1x32x128xbf16, #tpu.memory_space<vmem>>, %arg13: memref<1x1x128xf32, #tpu.memory_space<vmem>>, %arg14: memref<1x128x32xbf16, #tpu.memory_space<vmem>>, %arg15: memref<1x1x32xf32, #tpu.memory_space<vmem>>, %arg16: memref<2x8x32xf32, #tpu.memory_space<vmem>>) attributes {dimension_semantics = [#tpu.dimension_semantics<parallel>, #tpu.dimension_semantics<arbitrary>], iteration_bounds = array<i64: 1, 2>, scalar_prefetch = 0 : i64, scratch_operands = 0 : i64, tpu.core_type = #tpu.core_type<tc>, window_params = [{transform_indices = @transform_0, window_bounds = array<i64: 2, 8, 32>}, {transform_indices = @transform_1, window_bounds = array<i64: 2, 8, 8>}, {transform_indices = @transform_2, window_bounds = array<i64: 1, 1, 32>}, {transform_indices = @transform_3, window_bounds = array<i64: 1, 1, 32>}, {transform_indices = @transform_4, window_bounds = array<i64: 1, 32, 96>}, {transform_indices = @transform_5, window_bounds = array<i64: 1, 1, 96>}, {transform_indices = @transform_6, window_bounds = array<i64: 1, 4, 8, 32>}, {transform_indices = @transform_7, window_bounds = array<i64: 1, 1, 32>}, {transform_indices = @transform_8, window_bounds = array<i64: 1, 1, 32>}, {transform_indices = @transform_9, window_bounds = array<i64: 1, 1, 32>}, {transform_indices = @transform_10, window_bounds = array<i64: 1, 32, 128>}, {transform_indices = @transform_11, window_bounds = array<i64: 1, 1, 128>}, {transform_indices = @transform_12, window_bounds = array<i64: 1, 128, 32>}, {transform_indices = @transform_13, window_bounds = array<i64: 1, 1, 32>}, {transform_indices = @transform_14, window_bounds = array<i64: 2, 8, 32>}]} {
    %c0_i32 = arith.constant 0 : i32
    %0 = arith.cmpi eq, %arg1, %c0_i32 : i32
    %1 = arith.extui %0 : i1 to i32
    %c0_i32_0 = arith.constant 0 : i32
    %2 = arith.cmpi ne, %1, %c0_i32_0 : i32
    scf.if %2 {
      %c0_72 = arith.constant 0 : index
      %c0_73 = arith.constant 0 : index
      %c0_74 = arith.constant 0 : index
      %163 = vector.load %arg2[%c0_72, %c0_73, %c0_74] : memref<2x8x32xf32, #tpu.memory_space<vmem>>, vector<2x8x32xf32>
      %c0_75 = arith.constant 0 : index
      %c0_76 = arith.constant 0 : index
      %c0_77 = arith.constant 0 : index
      %164 = vector.load %arg16[%c0_75, %c0_76, %c0_77] : memref<2x8x32xf32, #tpu.memory_space<vmem>>, vector<2x8x32xf32>
      tpu.vector_store %arg16[%c0_75, %c0_76, %c0_77], %163 {strides = array<i32>} : memref<2x8x32xf32, #tpu.memory_space<vmem>>, vector<2x8x32xf32>,
    } else {
    }
    %c0 = arith.constant 0 : index
    %c0_1 = arith.constant 0 : index
    %c0_2 = arith.constant 0 : index
    %3 = vector.load %arg16[%c0, %c0_1, %c0_2] : memref<2x8x32xf32, #tpu.memory_space<vmem>>, vector<2x8x32xf32>
    %4 = vector.shape_cast %3 : vector<2x8x32xf32> to vector<16x32xf32>
    %c0_3 = arith.constant 0 : index
    %c0_4 = arith.constant 0 : index
    %c0_5 = arith.constant 0 : index
    %5 = vector.load %arg3[%c0_3, %c0_4, %c0_5] : memref<2x8x8xf32, #tpu.memory_space<vmem>>, vector<2x8x8xf32>
    %c0_6 = arith.constant 0 : index
    %c0_7 = arith.constant 0 : index
    %c0_8 = arith.constant 0 : index
    %6 = vector.load %arg4[%c0_6, %c0_7, %c0_8] : memref<1x1x32xf32, #tpu.memory_space<vmem>>, vector<1x1x32xf32>
    %7 = vector.shape_cast %6 : vector<1x1x32xf32> to vector<1x32xf32>
    %c0_9 = arith.constant 0 : index
    %c0_10 = arith.constant 0 : index
    %c0_11 = arith.constant 0 : index
    %8 = vector.load %arg5[%c0_9, %c0_10, %c0_11] : memref<1x1x32xf32, #tpu.memory_space<vmem>>, vector<1x1x32xf32>
    %9 = vector.shape_cast %8 : vector<1x1x32xf32> to vector<1x32xf32>
    %cst = arith.constant dense<0.000000e+00> : vector<16xf32>
    %10 = vector.multi_reduction <add>, %4, %cst [1] : vector<16x32xf32> to vector<16xf32>
    %11 = vector.shape_cast %10 : vector<16xf32> to vector<16x1xf32>
    %cst_12 = arith.constant 3.200000e+01 : f32
    %12 = vector.broadcast %cst_12 : f32 to vector<16x1xf32>
    %13 = arith.divf %11, %12 : vector<16x1xf32>
    %14 = vector.broadcast %13 : vector<16x1xf32> to vector<16x32xf32>
    %15 = arith.subf %4, %14 : vector<16x32xf32>
    %16 = arith.mulf %15, %15 : vector<16x32xf32>
    %cst_13 = arith.constant dense<0.000000e+00> : vector<16xf32>
    %17 = vector.multi_reduction <add>, %16, %cst_13 [1] : vector<16x32xf32> to vector<16xf32>
    %18 = vector.shape_cast %17 : vector<16xf32> to vector<16x1xf32>
    %cst_14 = arith.constant 3.200000e+01 : f32
    %19 = vector.broadcast %cst_14 : f32 to vector<16x1xf32>
    %20 = arith.divf %18, %19 : vector<16x1xf32>
    %21 = vector.broadcast %13 : vector<16x1xf32> to vector<16x32xf32>
    %22 = arith.subf %4, %21 : vector<16x32xf32>
    %cst_15 = arith.constant 9.99999974E-6 : f32
    %23 = vector.broadcast %cst_15 : f32 to vector<16x1xf32>
    %24 = arith.addf %20, %23 : vector<16x1xf32>
    %25 = math.rsqrt %24 : vector<16x1xf32>
    %26 = vector.broadcast %25 : vector<16x1xf32> to vector<16x32xf32>
    %27 = arith.mulf %22, %26 : vector<16x32xf32>
    %28 = vector.broadcast %7 : vector<1x32xf32> to vector<16x32xf32>
    %29 = arith.mulf %27, %28 : vector<16x32xf32>
    %30 = vector.broadcast %9 : vector<1x32xf32> to vector<16x32xf32>
    %31 = arith.addf %29, %30 : vector<16x32xf32>
    %32 = arith.truncf %31 : vector<16x32xf32> to vector<16x32xbf16>
    %c0_16 = arith.constant 0 : index
    %c0_17 = arith.constant 0 : index
    %c0_18 = arith.constant 0 : index
    %33 = vector.load %arg6[%c0_16, %c0_17, %c0_18] : memref<1x32x96xbf16, #tpu.memory_space<vmem>>, vector<1x32x96xbf16>
    %34 = vector.shape_cast %33 : vector<1x32x96xbf16> to vector<32x96xbf16>
    %cst_19 = arith.constant dense<0.000000e+00> : vector<16x96xf32>
    %35 = tpu.matmul %32, %34, %cst_19 {dimension_numbers = #tpu.dot_dimension_numbers<[1], [0], [0], [1], [0, 0, 1, 1], [], []>} : vector<16x32xbf16>, vector<32x96xbf16>, vector<16x96xf32> -> vector<16x96xf32>
    %c0_20 = arith.constant 0 : index
    %c0_21 = arith.constant 0 : index
    %c0_22 = arith.constant 0 : index
    %36 = vector.load %arg7[%c0_20, %c0_21, %c0_22] : memref<1x1x96xf32, #tpu.memory_space<vmem>>, vector<1x1x96xf32>
    %37 = vector.shape_cast %36 : vector<1x1x96xf32> to vector<1x96xf32>
    %38 = vector.broadcast %37 : vector<1x96xf32> to vector<16x96xf32>
    %39 = arith.addf %35, %38 : vector<16x96xf32>
    %40 = tpu.transpose %39, [1, 0] : vector<16x96xf32> -> vector<96x16xf32>
    %41 = vector.extract_strided_slice %40 {offsets = [0, 0], sizes = [32, 16], strides = [1, 1]} : vector<96x16xf32> to vector<32x16xf32>
    %42 = vector.shape_cast %41 : vector<32x16xf32> to vector<4x8x16xf32>
    %43 = vector.extract_strided_slice %40 {offsets = [32, 0], sizes = [32, 16], strides = [1, 1]} : vector<96x16xf32> to vector<32x16xf32>
    %44 = vector.shape_cast %43 : vector<32x16xf32> to vector<4x8x16xf32>
    %45 = vector.extract_strided_slice %40 {offsets = [64, 0], sizes = [32, 16], strides = [1, 1]} : vector<96x16xf32> to vector<32x16xf32>
    %46 = vector.shape_cast %45 : vector<32x16xf32> to vector<4x8x16xf32>
    %47 = tpu.transpose %42, [0, 2, 1] : vector<4x8x16xf32> -> vector<4x16x8xf32>
    %c0_23 = arith.constant 0 : index
    %c0_24 = arith.constant 0 : index
    %c0_25 = arith.constant 0 : index
    %c0_26 = arith.constant 0 : index
    %48 = vector.load %arg8[%c0_23, %c0_24, %c0_25, %c0_26] : memref<1x4x8x32xbf16, #tpu.memory_space<vmem>>, vector<1x4x8x32xbf16>
    %49 = vector.shape_cast %48 : vector<1x4x8x32xbf16> to vector<4x8x32xbf16>
    %50 = vector.extract_strided_slice %47 {offsets = [0, 0, 0], sizes = [4, 8, 8], strides = [1, 1, 1]} : vector<4x16x8xf32> to vector<4x8x8xf32>
    %51 = arith.truncf %50 : vector<4x8x8xf32> to vector<4x8x8xbf16>
    %52 = vector.extract_strided_slice %44 {offsets = [0, 0, 0], sizes = [4, 8, 8], strides = [1, 1, 1]} : vector<4x8x16xf32> to vector<4x8x8xf32>
    %53 = arith.truncf %52 : vector<4x8x8xf32> to vector<4x8x8xbf16>
    %54 = vector.extract_strided_slice %46 {offsets = [0, 0, 0], sizes = [4, 8, 8], strides = [1, 1, 1]} : vector<4x8x16xf32> to vector<4x8x8xf32>
    %55 = arith.truncf %54 : vector<4x8x8xf32> to vector<4x8x8xbf16>
    "tpu.trace_start"() <{level = 10 : i32, message = "hld,hdm->hlm"}> : () -> ()
    %cst_27 = arith.constant dense<0.000000e+00> : vector<4x8x8xf32>
    %56 = tpu.matmul %51, %53, %cst_27 {dimension_numbers = #tpu.dot_dimension_numbers<[2], [1], [1], [2], [0, 0, 0, 1, 1, 2], [0], [0]>} : vector<4x8x8xbf16>, vector<4x8x8xbf16>, vector<4x8x8xf32> -> vector<4x8x8xf32>
    "tpu.trace_stop"() : () -> ()
    %57 = vector.extract_strided_slice %5 {offsets = [0, 0, 0], sizes = [1, 8, 8], strides = [1, 1, 1]} : vector<2x8x8xf32> to vector<1x8x8xf32>
    %58 = vector.shape_cast %57 : vector<1x8x8xf32> to vector<8x8xf32>
    %59 = vector.shape_cast %58 : vector<8x8xf32> to vector<1x8x8xf32>
    %60 = vector.broadcast %59 : vector<1x8x8xf32> to vector<4x8x8xf32>
    %61 = arith.addf %56, %60 : vector<4x8x8xf32>
    %cst_28 = arith.constant dense<0xFF800000> : vector<4x8xf32>
    %62 = vector.multi_reduction <maximumf>, %61, %cst_28 [2] : vector<4x8x8xf32> to vector<4x8xf32>
    %63 = vector.shape_cast %62 : vector<4x8xf32> to vector<4x8x1xf32>
    %64 = vector.broadcast %63 : vector<4x8x1xf32> to vector<4x8x8xf32>
    %65 = arith.subf %61, %64 : vector<4x8x8xf32>
    %66 = math.exp %65 : vector<4x8x8xf32>
    %cst_29 = arith.constant dense<0.000000e+00> : vector<4x8xf32>
    %67 = vector.multi_reduction <add>, %66, %cst_29 [2] : vector<4x8x8xf32> to vector<4x8xf32>
    %68 = vector.shape_cast %67 : vector<4x8xf32> to vector<4x8x1xf32>
    %69 = tpu.reciprocal %68 {approx = true} : vector<4x8x1xf32> -> vector<4x8x1xf32>
    %70 = vector.broadcast %69 : vector<4x8x1xf32> to vector<4x8x8xf32>
    %71 = arith.mulf %66, %70 : vector<4x8x8xf32>
    %72 = arith.truncf %71 : vector<4x8x8xf32> to vector<4x8x8xbf16>
    "tpu.trace_start"() <{level = 10 : i32, message = "hlm,hem->hle"}> : () -> ()
    %cst_30 = arith.constant dense<0.000000e+00> : vector<4x8x8xf32>
    %73 = tpu.matmul %72, %55, %cst_30 {dimension_numbers = #tpu.dot_dimension_numbers<[2], [2], [1], [1], [0, 0, 0, 1, 1, 1], [0], [0]>} : vector<4x8x8xbf16>, vector<4x8x8xbf16>, vector<4x8x8xf32> -> vector<4x8x8xf32>
    "tpu.trace_stop"() : () -> ()
    %74 = arith.truncf %73 : vector<4x8x8xf32> to vector<4x8x8xbf16>
    "tpu.trace_start"() <{level = 10 : i32, message = "hld,hde->hle"}> : () -> ()
    %cst_31 = arith.constant dense<0.000000e+00> : vector<4x8x32xf32>
    %75 = tpu.matmul %74, %49, %cst_31 {dimension_numbers = #tpu.dot_dimension_numbers<[2], [1], [1], [2], [0, 0, 0, 1, 1, 2], [0], [0]>} : vector<4x8x8xbf16>, vector<4x8x32xbf16>, vector<4x8x32xf32> -> vector<4x8x32xf32>
    "tpu.trace_stop"() : () -> ()
    %cst_32 = arith.constant dense<0.000000e+00> : vector<8x32xf32>
    %76 = vector.multi_reduction <add>, %75, %cst_32 [0] : vector<4x8x32xf32> to vector<8x32xf32>
    %77 = vector.extract_strided_slice %47 {offsets = [0, 8, 0], sizes = [4, 8, 8], strides = [1, 1, 1]} : vector<4x16x8xf32> to vector<4x8x8xf32>
    %78 = arith.truncf %77 : vector<4x8x8xf32> to vector<4x8x8xbf16>
    %79 = vector.extract_strided_slice %44 {offsets = [0, 0, 8], sizes = [4, 8, 8], strides = [1, 1, 1]} : vector<4x8x16xf32> to vector<4x8x8xf32>
    %80 = arith.truncf %79 : vector<4x8x8xf32> to vector<4x8x8xbf16>
    %81 = vector.extract_strided_slice %46 {offsets = [0, 0, 8], sizes = [4, 8, 8], strides = [1, 1, 1]} : vector<4x8x16xf32> to vector<4x8x8xf32>
    %82 = arith.truncf %81 : vector<4x8x8xf32> to vector<4x8x8xbf16>
    "tpu.trace_start"() <{level = 10 : i32, message = "hld,hdm->hlm"}> : () -> ()
    %cst_33 = arith.constant dense<0.000000e+00> : vector<4x8x8xf32>
    %83 = tpu.matmul %78, %80, %cst_33 {dimension_numbers = #tpu.dot_dimension_numbers<[2], [1], [1], [2], [0, 0, 0, 1, 1, 2], [0], [0]>} : vector<4x8x8xbf16>, vector<4x8x8xbf16>, vector<4x8x8xf32> -> vector<4x8x8xf32>
    "tpu.trace_stop"() : () -> ()
    %84 = vector.extract_strided_slice %5 {offsets = [1, 0, 0], sizes = [1, 8, 8], strides = [1, 1, 1]} : vector<2x8x8xf32> to vector<1x8x8xf32>
    %85 = vector.shape_cast %84 : vector<1x8x8xf32> to vector<8x8xf32>
    %86 = vector.shape_cast %85 : vector<8x8xf32> to vector<1x8x8xf32>
    %87 = vector.broadcast %86 : vector<1x8x8xf32> to vector<4x8x8xf32>
    %88 = arith.addf %83, %87 : vector<4x8x8xf32>
    %cst_34 = arith.constant dense<0xFF800000> : vector<4x8xf32>
    %89 = vector.multi_reduction <maximumf>, %88, %cst_34 [2] : vector<4x8x8xf32> to vector<4x8xf32>
    %90 = vector.shape_cast %89 : vector<4x8xf32> to vector<4x8x1xf32>
    %91 = vector.broadcast %90 : vector<4x8x1xf32> to vector<4x8x8xf32>
    %92 = arith.subf %88, %91 : vector<4x8x8xf32>
    %93 = math.exp %92 : vector<4x8x8xf32>
    %cst_35 = arith.constant dense<0.000000e+00> : vector<4x8xf32>
    %94 = vector.multi_reduction <add>, %93, %cst_35 [2] : vector<4x8x8xf32> to vector<4x8xf32>
    %95 = vector.shape_cast %94 : vector<4x8xf32> to vector<4x8x1xf32>
    %96 = tpu.reciprocal %95 {approx = true} : vector<4x8x1xf32> -> vector<4x8x1xf32>
    %97 = vector.broadcast %96 : vector<4x8x1xf32> to vector<4x8x8xf32>
    %98 = arith.mulf %93, %97 : vector<4x8x8xf32>
    %99 = arith.truncf %98 : vector<4x8x8xf32> to vector<4x8x8xbf16>
    "tpu.trace_start"() <{level = 10 : i32, message = "hlm,hem->hle"}> : () -> ()
    %cst_36 = arith.constant dense<0.000000e+00> : vector<4x8x8xf32>
    %100 = tpu.matmul %99, %82, %cst_36 {dimension_numbers = #tpu.dot_dimension_numbers<[2], [2], [1], [1], [0, 0, 0, 1, 1, 1], [0], [0]>} : vector<4x8x8xbf16>, vector<4x8x8xbf16>, vector<4x8x8xf32> -> vector<4x8x8xf32>
    "tpu.trace_stop"() : () -> ()
    %101 = arith.truncf %100 : vector<4x8x8xf32> to vector<4x8x8xbf16>
    "tpu.trace_start"() <{level = 10 : i32, message = "hld,hde->hle"}> : () -> ()
    %cst_37 = arith.constant dense<0.000000e+00> : vector<4x8x32xf32>
    %102 = tpu.matmul %101, %49, %cst_37 {dimension_numbers = #tpu.dot_dimension_numbers<[2], [1], [1], [2], [0, 0, 0, 1, 1, 2], [0], [0]>} : vector<4x8x8xbf16>, vector<4x8x32xbf16>, vector<4x8x32xf32> -> vector<4x8x32xf32>
    "tpu.trace_stop"() : () -> ()
    %cst_38 = arith.constant dense<0.000000e+00> : vector<8x32xf32>
    %103 = vector.multi_reduction <add>, %102, %cst_38 [0] : vector<4x8x32xf32> to vector<8x32xf32>
    %104 = tpu.concatenate %76, %103 in 0 : vector<8x32xf32>, vector<8x32xf32> -> vector<16x32xf32>
    %c0_39 = arith.constant 0 : index
    %c0_40 = arith.constant 0 : index
    %c0_41 = arith.constant 0 : index
    %105 = vector.load %arg9[%c0_39, %c0_40, %c0_41] : memref<1x1x32xf32, #tpu.memory_space<vmem>>, vector<1x1x32xf32>
    %106 = vector.shape_cast %105 : vector<1x1x32xf32> to vector<1x32xf32>
    %107 = vector.broadcast %106 : vector<1x32xf32> to vector<16x32xf32>
    %108 = arith.addf %104, %107 : vector<16x32xf32>
    %109 = arith.addf %4, %108 : vector<16x32xf32>
    %c0_42 = arith.constant 0 : index
    %c0_43 = arith.constant 0 : index
    %c0_44 = arith.constant 0 : index
    %110 = vector.load %arg10[%c0_42, %c0_43, %c0_44] : memref<1x1x32xf32, #tpu.memory_space<vmem>>, vector<1x1x32xf32>
    %111 = vector.shape_cast %110 : vector<1x1x32xf32> to vector<1x32xf32>
    %c0_45 = arith.constant 0 : index
    %c0_46 = arith.constant 0 : index
    %c0_47 = arith.constant 0 : index
    %112 = vector.load %arg11[%c0_45, %c0_46, %c0_47] : memref<1x1x32xf32, #tpu.memory_space<vmem>>, vector<1x1x32xf32>
    %113 = vector.shape_cast %112 : vector<1x1x32xf32> to vector<1x32xf32>
    %cst_48 = arith.constant dense<0.000000e+00> : vector<16xf32>
    %114 = vector.multi_reduction <add>, %109, %cst_48 [1] : vector<16x32xf32> to vector<16xf32>
    %115 = vector.shape_cast %114 : vector<16xf32> to vector<16x1xf32>
    %cst_49 = arith.constant 3.200000e+01 : f32
    %116 = vector.broadcast %cst_49 : f32 to vector<16x1xf32>
    %117 = arith.divf %115, %116 : vector<16x1xf32>
    %118 = vector.broadcast %117 : vector<16x1xf32> to vector<16x32xf32>
    %119 = arith.subf %109, %118 : vector<16x32xf32>
    %120 = arith.mulf %119, %119 : vector<16x32xf32>
    %cst_50 = arith.constant dense<0.000000e+00> : vector<16xf32>
    %121 = vector.multi_reduction <add>, %120, %cst_50 [1] : vector<16x32xf32> to vector<16xf32>
    %122 = vector.shape_cast %121 : vector<16xf32> to vector<16x1xf32>
    %cst_51 = arith.constant 3.200000e+01 : f32
    %123 = vector.broadcast %cst_51 : f32 to vector<16x1xf32>
    %124 = arith.divf %122, %123 : vector<16x1xf32>
    %125 = vector.broadcast %117 : vector<16x1xf32> to vector<16x32xf32>
    %126 = arith.subf %109, %125 : vector<16x32xf32>
    %cst_52 = arith.constant 9.99999974E-6 : f32
    %127 = vector.broadcast %cst_52 : f32 to vector<16x1xf32>
    %128 = arith.addf %124, %127 : vector<16x1xf32>
    %129 = math.rsqrt %128 : vector<16x1xf32>
    %130 = vector.broadcast %129 : vector<16x1xf32> to vector<16x32xf32>
    %131 = arith.mulf %126, %130 : vector<16x32xf32>
    %132 = vector.broadcast %111 : vector<1x32xf32> to vector<16x32xf32>
    %133 = arith.mulf %131, %132 : vector<16x32xf32>
    %134 = vector.broadcast %113 : vector<1x32xf32> to vector<16x32xf32>
    %135 = arith.addf %133, %134 : vector<16x32xf32>
    %136 = arith.truncf %135 : vector<16x32xf32> to vector<16x32xbf16>
    %c0_53 = arith.constant 0 : index
    %c0_54 = arith.constant 0 : index
    %c0_55 = arith.constant 0 : index
    %137 = vector.load %arg12[%c0_53, %c0_54, %c0_55] : memref<1x32x128xbf16, #tpu.memory_space<vmem>>, vector<1x32x128xbf16>
    %138 = vector.shape_cast %137 : vector<1x32x128xbf16> to vector<32x128xbf16>
    %cst_56 = arith.constant dense<0.000000e+00> : vector<16x128xf32>
    %139 = tpu.matmul %136, %138, %cst_56 {dimension_numbers = #tpu.dot_dimension_numbers<[1], [0], [0], [1], [0, 0, 1, 1], [], []>} : vector<16x32xbf16>, vector<32x128xbf16>, vector<16x128xf32> -> vector<16x128xf32>
    %c0_57 = arith.constant 0 : index
    %c0_58 = arith.constant 0 : index
    %c0_59 = arith.constant 0 : index
    %140 = vector.load %arg13[%c0_57, %c0_58, %c0_59] : memref<1x1x128xf32, #tpu.memory_space<vmem>>, vector<1x1x128xf32>
    %141 = vector.shape_cast %140 : vector<1x1x128xf32> to vector<1x128xf32>
    %142 = vector.broadcast %141 : vector<1x128xf32> to vector<16x128xf32>
    %143 = arith.addf %139, %142 : vector<16x128xf32>
    %cst_60 = arith.constant 1.702000e+00 : f32
    %144 = vector.broadcast %cst_60 : f32 to vector<16x128xf32>
    %145 = arith.mulf %144, %143 : vector<16x128xf32>
    %146 = arith.negf %145 : vector<16x128xf32>
    %147 = math.exp %146 : vector<16x128xf32>
    %cst_61 = arith.constant 1.000000e+00 : f32
    %148 = vector.broadcast %cst_61 : f32 to vector<16x128xf32>
    %149 = arith.addf %148, %147 : vector<16x128xf32>
    %150 = arith.divf %148, %149 : vector<16x128xf32>
    %151 = arith.mulf %143, %150 : vector<16x128xf32>
    %152 = arith.truncf %151 : vector<16x128xf32> to vector<16x128xbf16>
    %c0_62 = arith.constant 0 : index
    %c0_63 = arith.constant 0 : index
    %c0_64 = arith.constant 0 : index
    %153 = vector.load %arg14[%c0_62, %c0_63, %c0_64] : memref<1x128x32xbf16, #tpu.memory_space<vmem>>, vector<1x128x32xbf16>
    %154 = vector.shape_cast %153 : vector<1x128x32xbf16> to vector<128x32xbf16>
    %cst_65 = arith.constant dense<0.000000e+00> : vector<16x32xf32>
    %155 = tpu.matmul %152, %154, %cst_65 {dimension_numbers = #tpu.dot_dimension_numbers<[1], [0], [0], [1], [0, 0, 1, 1], [], []>} : vector<16x128xbf16>, vector<128x32xbf16>, vector<16x32xf32> -> vector<16x32xf32>
    %c0_66 = arith.constant 0 : index
    %c0_67 = arith.constant 0 : index
    %c0_68 = arith.constant 0 : index
    %156 = vector.load %arg15[%c0_66, %c0_67, %c0_68] : memref<1x1x32xf32, #tpu.memory_space<vmem>>, vector<1x1x32xf32>
    %157 = vector.shape_cast %156 : vector<1x1x32xf32> to vector<1x32xf32>
    %158 = vector.broadcast %157 : vector<1x32xf32> to vector<16x32xf32>
    %159 = arith.addf %155, %158 : vector<16x32xf32>
    %160 = arith.addf %109, %159 : vector<16x32xf32>
    %161 = vector.shape_cast %160 : vector<16x32xf32> to vector<2x8x32xf32>
    %c0_69 = arith.constant 0 : index
    %c0_70 = arith.constant 0 : index
    %c0_71 = arith.constant 0 : index
    %162 = vector.load %arg16[%c0_69, %c0_70, %c0_71] : memref<2x8x32xf32, #tpu.memory_space<vmem>>, vector<2x8x32xf32>
    tpu.vector_store %arg16[%c0_69, %c0_70, %c0_71], %161 {strides = array<i32>} : memref<2x8x32xf32, #tpu.memory_space<vmem>>, vector<2x8x32xf32>,
    return
  }
  func.func @transform_0(%arg0: i32, %arg1: i32) -> (i32, i32, i32) {
    %c0_i32 = arith.constant 0 : i32
    %c0_i32_0 = arith.constant 0 : i32
    %c0_i32_1 = arith.constant 0 : i32
    return %arg0, %c0_i32, %c0_i32_0 : i32, i32, i32
  }
  func.func @transform_1(%arg0: i32, %arg1: i32) -> (i32, i32, i32) {
    %c0_i32 = arith.constant 0 : i32
    %c0_i32_0 = arith.constant 0 : i32
    %c0_i32_1 = arith.constant 0 : i32
    return %arg0, %c0_i32, %c0_i32_0 : i32, i32, i32
  }
  func.func @transform_2(%arg0: i32, %arg1: i32) -> (i32, i32, i32) {
    %c0_i32 = arith.constant 0 : i32
    %c0_i32_0 = arith.constant 0 : i32
    %c0_i32_1 = arith.constant 0 : i32
    return %arg1, %c0_i32, %c0_i32_0 : i32, i32, i32
  }
  func.func @transform_3(%arg0: i32, %arg1: i32) -> (i32, i32, i32) {
    %c0_i32 = arith.constant 0 : i32
    %c0_i32_0 = arith.constant 0 : i32
    %c0_i32_1 = arith.constant 0 : i32
    return %arg1, %c0_i32, %c0_i32_0 : i32, i32, i32
  }
  func.func @transform_4(%arg0: i32, %arg1: i32) -> (i32, i32, i32) {
    %c0_i32 = arith.constant 0 : i32
    %c0_i32_0 = arith.constant 0 : i32
    %c0_i32_1 = arith.constant 0 : i32
    return %arg1, %c0_i32, %c0_i32_0 : i32, i32, i32
  }
  func.func @transform_5(%arg0: i32, %arg1: i32) -> (i32, i32, i32) {
    %c0_i32 = arith.constant 0 : i32
    %c0_i32_0 = arith.constant 0 : i32
    %c0_i32_1 = arith.constant 0 : i32
    return %arg1, %c0_i32, %c0_i32_0 : i32, i32, i32
  }
  func.func @transform_6(%arg0: i32, %arg1: i32) -> (i32, i32, i32, i32) {
    %c0_i32 = arith.constant 0 : i32
    %c0_i32_0 = arith.constant 0 : i32
    %c0_i32_1 = arith.constant 0 : i32
    %c0_i32_2 = arith.constant 0 : i32
    return %arg1, %c0_i32, %c0_i32_0, %c0_i32_1 : i32, i32, i32, i32
  }
  func.func @transform_7(%arg0: i32, %arg1: i32) -> (i32, i32, i32) {
    %c0_i32 = arith.constant 0 : i32
    %c0_i32_0 = arith.constant 0 : i32
    %c0_i32_1 = arith.constant 0 : i32
    return %arg1, %c0_i32, %c0_i32_0 : i32, i32, i32
  }
  func.func @transform_8(%arg0: i32, %arg1: i32) -> (i32, i32, i32) {
    %c0_i32 = arith.constant 0 : i32
    %c0_i32_0 = arith.constant 0 : i32
    %c0_i32_1 = arith.constant 0 : i32
    return %arg1, %c0_i32, %c0_i32_0 : i32, i32, i32
  }
  func.func @transform_9(%arg0: i32, %arg1: i32) -> (i32, i32, i32) {
    %c0_i32 = arith.constant 0 : i32
    %c0_i32_0 = arith.constant 0 : i32
    %c0_i32_1 = arith.constant 0 : i32
    return %arg1, %c0_i32, %c0_i32_0 : i32, i32, i32
  }
  func.func @transform_10(%arg0: i32, %arg1: i32) -> (i32, i32, i32) {
    %c0_i32 = arith.constant 0 : i32
    %c0_i32_0 = arith.constant 0 : i32
    %c0_i32_1 = arith.constant 0 : i32
    return %arg1, %c0_i32, %c0_i32_0 : i32, i32, i32
  }
  func.func @transform_11(%arg0: i32, %arg1: i32) -> (i32, i32, i32) {
    %c0_i32 = arith.constant 0 : i32
    %c0_i32_0 = arith.constant 0 : i32
    %c0_i32_1 = arith.constant 0 : i32
    return %arg1, %c0_i32, %c0_i32_0 : i32, i32, i32
  }
  func.func @transform_12(%arg0: i32, %arg1: i32) -> (i32, i32, i32) {
    %c0_i32 = arith.constant 0 : i32
    %c0_i32_0 = arith.constant 0 : i32
    %c0_i32_1 = arith.constant 0 : i32
    return %arg1, %c0_i32, %c0_i32_0 : i32, i32, i32
  }
  func.func @transform_13(%arg0: i32, %arg1: i32) -> (i32, i32, i32) {
    %c0_i32 = arith.constant 0 : i32
    %c0_i32_0 = arith.constant 0 : i32
    %c0_i32_1 = arith.constant 0 : i32
    return %arg1, %c0_i32, %c0_i32_0 : i32, i32, i32
  }
  func.func @transform_14(%arg0: i32, %arg1: i32) -> (i32, i32, i32) {
    %c0_i32 = arith.constant 0 : i32
    %c0_i32_0 = arith.constant 0 : i32
    %c0_i32_1 = arith.constant 0 : i32
    return %arg0, %c0_i32, %c0_i32_0 : i32, i32, i32
  }
}

</mosaic_0001>

<llo_original>
// kernel: tpu_custom_call.1
$region0: #{tpu_custom_call.1}
  #allocation0 [shape = 'u32[]', space=smem, size = 0x4, offset = 0x4, fixed_abs, tag = 'smem constant byte address 0x4 - core index']
  #allocation1 [shape = 'u32[72,128]{1,0:T(1,128)}', space=vmem, size = 0x9000, scoped, tag = 'internal scratch']
  %s0 = inlined_call_operand.vmem [shape: f32[2,8,32], index: 0, kind: input, shape index: {}]
  %s1 = inlined_call_operand.vmem [shape: f32[2,8,8], index: 1, kind: input, shape index: {}]
  %s2 = inlined_call_operand.vmem [shape: f32[2,1,32], index: 2, kind: input, shape index: {}]
  %s3 = inlined_call_operand.vmem [shape: f32[2,1,32], index: 3, kind: input, shape index: {}]
  %s4 = inlined_call_operand.vmem [shape: bf16[2,32,96], index: 4, kind: input, shape index: {}]
  %s5 = inlined_call_operand.vmem [shape: f32[2,1,96], index: 5, kind: input, shape index: {}]
  %s6 = inlined_call_operand.vmem [shape: bf16[2,4,8,32], index: 6, kind: input, shape index: {}]
  %s7 = inlined_call_operand.vmem [shape: f32[2,1,32], index: 7, kind: input, shape index: {}]
  %s8 = inlined_call_operand.vmem [shape: f32[2,1,32], index: 8, kind: input, shape index: {}]
  %s9 = inlined_call_operand.vmem [shape: f32[2,1,32], index: 9, kind: input, shape index: {}]
  %s10 = inlined_call_operand.vmem [shape: bf16[2,32,128], index: 10, kind: input, shape index: {}]
  %s11 = inlined_call_operand.vmem [shape: f32[2,1,128], index: 11, kind: input, shape index: {}]
  %s12 = inlined_call_operand.vmem [shape: bf16[2,128,32], index: 12, kind: input, shape index: {}]
  %s13 = inlined_call_operand.vmem [shape: f32[2,1,32], index: 13, kind: input, shape index: {}]
  %s14 = inlined_call_operand.hbm [shape: f32[2,8,32], index: 14, kind: output, shape index: {}]
  %s15 = sld [smem:[#allocation0]]
  $region93: #{tpu_custom_call.1} parent=0
    _
  %s17 = ssub.s32 1, %s15
  %s18 = scalar_select 0, %s17, %s15
  $region1: #{tpu_custom_call.1} parent=0
    #allocation2 [shape = 'u8[8192]{0}', space=vmem, size = 0x2000, scoped, tag = 'output window, operand 0, single buffered']
    #allocation3 [shape = 's32[2]{0}', space=sflag, size = 0x8, scoped, tag = 'scoped memory for tpu_custom_call.1']
    %19 = vsyncpa [#allocation3], 0
    loop: start=0, step=1, limit=4
    $region2: #{tpu_custom_call.1} parent=1 // loop_pre_header
      _
    $region3: #{tpu_custom_call.1} parent=1 // loop_header
      %s21 = sphi 0, %s25
      %p22 = scmp.ge.s32.totalorder %s21, 4
      %s28 = sphi 0, %s40
      %s29 = sphi 0, %s36
      %s30 = sphi 0, %s28
      %s31 = sphi 0, %s29
      %s32 = sphi 0, %s30
      %s33 = sphi 0, %s31
      %s43 = sphi 0, %s45
      %s46 = sphi 0, %s43
      %s47 = sphi 0, %s46
      %s63 = sphi 0, %s47
      %s69 = sphi 0, %s71
      %s72 = sphi 0, %s69
      %s73 = sphi 0, %s72
      %s89 = sphi 0, %s73
      %s95 = sphi 0, %s97
      %s98 = sphi 0, %s95
      %s99 = sphi 0, %s98
      %s115 = sphi 0, %s99
      %s121 = sphi 0, %s123
      %s124 = sphi 0, %s121
      %s125 = sphi 0, %s124
      %s141 = sphi 0, %s125
      %s147 = sphi 0, %s149
      %s150 = sphi 0, %s147
      %s151 = sphi 0, %s150
      %s167 = sphi 0, %s151
      %s173 = sphi 0, %s175
      %s176 = sphi 0, %s173
      %s177 = sphi 0, %s176
      %s193 = sphi 0, %s177
      %s199 = sphi 0, %s201
      %s202 = sphi 0, %s199
      %s203 = sphi 0, %s202
      %s219 = sphi 0, %s203
      %s225 = sphi 0, %s227
      %s228 = sphi 0, %s225
      %s229 = sphi 0, %s228
      %s245 = sphi 0, %s229
      %s251 = sphi 0, %s253
      %s254 = sphi 0, %s251
      %s255 = sphi 0, %s254
      %s271 = sphi 0, %s255
      %s277 = sphi 0, %s279
      %s280 = sphi 0, %s277
      %s281 = sphi 0, %s280
      %s297 = sphi 0, %s281
      %s303 = sphi 0, %s305
      %s306 = sphi 0, %s303
      %s307 = sphi 0, %s306
      %s323 = sphi 0, %s307
      %s329 = sphi 0, %s331
      %s332 = sphi 0, %s329
      %s333 = sphi 0, %s332
      %s349 = sphi 0, %s333
      %s355 = sphi 0, %s357
      %s358 = sphi 0, %s355
      %s359 = sphi 0, %s358
      %s375 = sphi 0, %s359
      %s381 = sphi 0, %s383
      %s384 = sphi 0, %s381
      %s385 = sphi 0, %s384
      %s401 = sphi 0, %s385
      %s407 = sphi 0, %s409
      %s410 = sphi 0, %s407
      %s411 = sphi 0, %s410
      %s427 = sphi 0, %s411
    $region4: #{tpu_custom_call.1} parent=1 // loop_header_branch
      %24 = sbr.rel (%p22) target = $region8
    $region5: #{tpu_custom_call.1} parent=1 // loop_body
      %s26 = ssub.s32 %s21, 1
      %s27 = ssub.s32 %s21, 2
      %s34 = sadd.s32 1, %s29
      %p35 = scmp.ge.s32.totalorder %s34, 2
      %s36 = scalar_select %p35, 0, %s34
      %s37 = sadd.s32 1, %s28
      %s38 = scalar_select %p35, %s37, %s28
      %p39 = scmp.ge.s32.totalorder %s38, 1
      %s40 = scalar_select %p39, 0, %s38
      %s41 = ssub.s32 %s28, %s40
      %p42 = scmp.eq.s32.totalorder %s41, 0
      %s44 = sadd.s32 %s43, 1
      %s45 = scalar_select %p42, %s43, %s44
      %p48 = pneg %p42
      %p49 = scmp.eq.s32.totalorder %s21, 1
      %p50 = por %p48, %p49
      %p51 = scmp.ne.s32.totalorder %s43, %s46
      %p52 = scmp.eq.s32.totalorder %s21, 0
      %p53 = por %p51, %p52
      %p54 = scmp.ne.s32.totalorder %s43, %s46
      %p55 = scmp.eq.s32.totalorder %s26, 1
      %p56 = por %p54, %p55
      %p57 = scmp.ne.s32.totalorder %s46, %s47
      %p58 = scmp.eq.s32.totalorder %s26, 0
      %p59 = por %p57, %p58
      %p60 = scmp.ne.s32.totalorder %s46, %s47
      %p61 = scmp.eq.s32.totalorder %s27, 1
      %p62 = por %p60, %p61
      %p64 = scmp.ne.s32.totalorder %s47, %s63
      %p65 = scmp.eq.s32.totalorder %s27, 0
      %p66 = por %p64, %p65
      %s67 = ssub.s32 %s28, %s40
      %p68 = scmp.eq.s32.totalorder %s67, 0
      %s70 = sadd.s32 %s69, 1
      %s71 = scalar_select %p68, %s69, %s70
      %p74 = pneg %p68
      %p75 = scmp.eq.s32.totalorder %s21, 1
      %p76 = por %p74, %p75
      %p77 = scmp.ne.s32.totalorder %s69, %s72
      %p78 = scmp.eq.s32.totalorder %s21, 0
      %p79 = por %p77, %p78
      %p80 = scmp.ne.s32.totalorder %s69, %s72
      %p81 = scmp.eq.s32.totalorder %s26, 1
      %p82 = por %p80, %p81
      %p83 = scmp.ne.s32.totalorder %s72, %s73
      %p84 = scmp.eq.s32.totalorder %s26, 0
      %p85 = por %p83, %p84
      %p86 = scmp.ne.s32.totalorder %s72, %s73
      %p87 = scmp.eq.s32.totalorder %s27, 1
      %p88 = por %p86, %p87
      %p90 = scmp.ne.s32.totalorder %s73, %s89
      %p91 = scmp.eq.s32.totalorder %s27, 0
      %p92 = por %p90, %p91
      %s93 = ssub.s32 %s29, %s36
      %p94 = scmp.eq.s32.totalorder %s93, 0
      %s96 = sadd.s32 %s95, 1
      %s97 = scalar_select %p94, %s95, %s96
      %p100 = pneg %p94
      %p101 = scmp.eq.s32.totalorder %s21, 1
      %p102 = por %p100, %p101
      %p103 = scmp.ne.s32.totalorder %s95, %s98
      %p104 = scmp.eq.s32.totalorder %s21, 0
      %p105 = por %p103, %p104
      %p106 = scmp.ne.s32.totalorder %s95, %s98
      %p107 = scmp.eq.s32.totalorder %s26, 1
      %p108 = por %p106, %p107
      %p109 = scmp.ne.s32.totalorder %s98, %s99
      %p110 = scmp.eq.s32.totalorder %s26, 0
      %p111 = por %p109, %p110
      %p112 = scmp.ne.s32.totalorder %s98, %s99
      %p113 = scmp.eq.s32.totalorder %s27, 1
      %p114 = por %p112, %p113
      %p116 = scmp.ne.s32.totalorder %s99, %s115
      %p117 = scmp.eq.s32.totalorder %s27, 0
      %p118 = por %p116, %p117
      %s119 = ssub.s32 %s29, %s36
      %p120 = scmp.eq.s32.totalorder %s119, 0
      %s122 = sadd.s32 %s121, 1
      %s123 = scalar_select %p120, %s121, %s122
      %p126 = pneg %p120
      %p127 = scmp.eq.s32.totalorder %s21, 1
      %p128 = por %p126, %p127
      %p129 = scmp.ne.s32.totalorder %s121, %s124
      %p130 = scmp.eq.s32.totalorder %s21, 0
      %p131 = por %p129, %p130
      %p132 = scmp.ne.s32.totalorder %s121, %s124
      %p133 = scmp.eq.s32.totalorder %s26, 1
      %p134 = por %p132, %p133
      %p135 = scmp.ne.s32.totalorder %s124, %s125
      %p136 = scmp.eq.s32.totalorder %s26, 0
      %p137 = por %p135, %p136
      %p138 = scmp.ne.s32.totalorder %s124, %s125
      %p139 = scmp.eq.s32.totalorder %s27, 1
      %p140 = por %p138, %p139
      %p142 = scmp.ne.s32.totalorder %s125, %s141
      %p143 = scmp.eq.s32.totalorder %s27, 0
      %p144 = por %p142, %p143
      %s145 = ssub.s32 %s29, %s36
      %p146 = scmp.eq.s32.totalorder %s145, 0
      %s148 = sadd.s32 %s147, 1
      %s149 = scalar_select %p146, %s147, %s148
      %p152 = pneg %p146
      %p153 = scmp.eq.s32.totalorder %s21, 1
      %p154 = por %p152, %p153
      %p155 = scmp.ne.s32.totalorder %s147, %s150
      %p156 = scmp.eq.s32.totalorder %s21, 0
      %p157 = por %p155, %p156
      %p158 = scmp.ne.s32.totalorder %s147, %s150
      %p159 = scmp.eq.s32.totalorder %s26, 1
      %p160 = por %p158, %p159
      %p161 = scmp.ne.s32.totalorder %s150, %s151
      %p162 = scmp.eq.s32.totalorder %s26, 0
      %p163 = por %p161, %p162
      %p164 = scmp.ne.s32.totalorder %s150, %s151
      %p165 = scmp.eq.s32.totalorder %s27, 1
      %p166 = por %p164, %p165
      %p168 = scmp.ne.s32.totalorder %s151, %s167
      %p169 = scmp.eq.s32.totalorder %s27, 0
      %p170 = por %p168, %p169
      %s171 = ssub.s32 %s29, %s36
      %p172 = scmp.eq.s32.totalorder %s171, 0
      %s174 = sadd.s32 %s173, 1
      %s175 = scalar_select %p172, %s173, %s174
      %p178 = pneg %p172
      %p179 = scmp.eq.s32.totalorder %s21, 1
      %p180 = por %p178, %p179
      %p181 = scmp.ne.s32.totalorder %s173, %s176
      %p182 = scmp.eq.s32.totalorder %s21, 0
      %p183 = por %p181, %p182
      %p184 = scmp.ne.s32.totalorder %s173, %s176
      %p185 = scmp.eq.s32.totalorder %s26, 1
      %p186 = por %p184, %p185
      %p187 = scmp.ne.s32.totalorder %s176, %s177
      %p188 = scmp.eq.s32.totalorder %s26, 0
      %p189 = por %p187, %p188
      %p190 = scmp.ne.s32.totalorder %s176, %s177
      %p191 = scmp.eq.s32.totalorder %s27, 1
      %p192 = por %p190, %p191
      %p194 = scmp.ne.s32.totalorder %s177, %s193
      %p195 = scmp.eq.s32.totalorder %s27, 0
      %p196 = por %p194, %p195
      %s197 = ssub.s32 %s29, %s36
      %p198 = scmp.eq.s32.totalorder %s197, 0
      %s200 = sadd.s32 %s199, 1
      %s201 = scalar_select %p198, %s199, %s200
      %p204 = pneg %p198
      %p205 = scmp.eq.s32.totalorder %s21, 1
      %p206 = por %p204, %p205
      %p207 = scmp.ne.s32.totalorder %s199, %s202
      %p208 = scmp.eq.s32.totalorder %s21, 0
      %p209 = por %p207, %p208
      %p210 = scmp.ne.s32.totalorder %s199, %s202
      %p211 = scmp.eq.s32.totalorder %s26, 1
      %p212 = por %p210, %p211
      %p213 = scmp.ne.s32.totalorder %s202, %s203
      %p214 = scmp.eq.s32.totalorder %s26, 0
      %p215 = por %p213, %p214
      %p216 = scmp.ne.s32.totalorder %s202, %s203
      %p217 = scmp.eq.s32.totalorder %s27, 1
      %p218 = por %p216, %p217
      %p220 = scmp.ne.s32.totalorder %s203, %s219
      %p221 = scmp.eq.s32.totalorder %s27, 0
      %p222 = por %p220, %p221
      %s223 = ssub.s32 %s29, %s36
      %p224 = scmp.eq.s32.totalorder %s223, 0
      %s226 = sadd.s32 %s225, 1
      %s227 = scalar_select %p224, %s225, %s226
      %p230 = pneg %p224
      %p231 = scmp.eq.s32.totalorder %s21, 1
      %p232 = por %p230, %p231
      %p233 = scmp.ne.s32.totalorder %s225, %s228
      %p234 = scmp.eq.s32.totalorder %s21, 0
      %p235 = por %p233, %p234
      %p236 = scmp.ne.s32.totalorder %s225, %s228
      %p237 = scmp.eq.s32.totalorder %s26, 1
      %p238 = por %p236, %p237
      %p239 = scmp.ne.s32.totalorder %s228, %s229
      %p240 = scmp.eq.s32.totalorder %s26, 0
      %p241 = por %p239, %p240
      %p242 = scmp.ne.s32.totalorder %s228, %s229
      %p243 = scmp.eq.s32.totalorder %s27, 1
      %p244 = por %p242, %p243
      %p246 = scmp.ne.s32.totalorder %s229, %s245
      %p247 = scmp.eq.s32.totalorder %s27, 0
      %p248 = por %p246, %p247
      %s249 = ssub.s32 %s29, %s36
      %p250 = scmp.eq.s32.totalorder %s249, 0
      %s252 = sadd.s32 %s251, 1
      %s253 = scalar_select %p250, %s251, %s252
      %p256 = pneg %p250
      %p257 = scmp.eq.s32.totalorder %s21, 1
      %p258 = por %p256, %p257
      %p259 = scmp.ne.s32.totalorder %s251, %s254
      %p260 = scmp.eq.s32.totalorder %s21, 0
      %p261 = por %p259, %p260
      %p262 = scmp.ne.s32.totalorder %s251, %s254
      %p263 = scmp.eq.s32.totalorder %s26, 1
      %p264 = por %p262, %p263
      %p265 = scmp.ne.s32.totalorder %s254, %s255
      %p266 = scmp.eq.s32.totalorder %s26, 0
      %p267 = por %p265, %p266
      %p268 = scmp.ne.s32.totalorder %s254, %s255
      %p269 = scmp.eq.s32.totalorder %s27, 1
      %p270 = por %p268, %p269
      %p272 = scmp.ne.s32.totalorder %s255, %s271
      %p273 = scmp.eq.s32.totalorder %s27, 0
      %p274 = por %p272, %p273
      %s275 = ssub.s32 %s29, %s36
      %p276 = scmp.eq.s32.totalorder %s275, 0
      %s278 = sadd.s32 %s277, 1
      %s279 = scalar_select %p276, %s277, %s278
      %p282 = pneg %p276
      %p283 = scmp.eq.s32.totalorder %s21, 1
      %p284 = por %p282, %p283
      %p285 = scmp.ne.s32.totalorder %s277, %s280
      %p286 = scmp.eq.s32.totalorder %s21, 0
      %p287 = por %p285, %p286
      %p288 = scmp.ne.s32.totalorder %s277, %s280
      %p289 = scmp.eq.s32.totalorder %s26, 1
      %p290 = por %p288, %p289
      %p291 = scmp.ne.s32.totalorder %s280, %s281
      %p292 = scmp.eq.s32.totalorder %s26, 0
      %p293 = por %p291, %p292
      %p294 = scmp.ne.s32.totalorder %s280, %s281
      %p295 = scmp.eq.s32.totalorder %s27, 1
      %p296 = por %p294, %p295
      %p298 = scmp.ne.s32.totalorder %s281, %s297
      %p299 = scmp.eq.s32.totalorder %s27, 0
      %p300 = por %p298, %p299
      %s301 = ssub.s32 %s29, %s36
      %p302 = scmp.eq.s32.totalorder %s301, 0
      %s304 = sadd.s32 %s303, 1
      %s305 = scalar_select %p302, %s303, %s304
      %p308 = pneg %p302
      %p309 = scmp.eq.s32.totalorder %s21, 1
      %p310 = por %p308, %p309
      %p311 = scmp.ne.s32.totalorder %s303, %s306
      %p312 = scmp.eq.s32.totalorder %s21, 0
      %p313 = por %p311, %p312
      %p314 = scmp.ne.s32.totalorder %s303, %s306
      %p315 = scmp.eq.s32.totalorder %s26, 1
      %p316 = por %p314, %p315
      %p317 = scmp.ne.s32.totalorder %s306, %s307
      %p318 = scmp.eq.s32.totalorder %s26, 0
      %p319 = por %p317, %p318
      %p320 = scmp.ne.s32.totalorder %s306, %s307
      %p321 = scmp.eq.s32.totalorder %s27, 1
      %p322 = por %p320, %p321
      %p324 = scmp.ne.s32.totalorder %s307, %s323
      %p325 = scmp.eq.s32.totalorder %s27, 0
      %p326 = por %p324, %p325
      %s327 = ssub.s32 %s29, %s36
      %p328 = scmp.eq.s32.totalorder %s327, 0
      %s330 = sadd.s32 %s329, 1
      %s331 = scalar_select %p328, %s329, %s330
      %p334 = pneg %p328
      %p335 = scmp.eq.s32.totalorder %s21, 1
      %p336 = por %p334, %p335
      %p337 = scmp.ne.s32.totalorder %s329, %s332
      %p338 = scmp.eq.s32.totalorder %s21, 0
      %p339 = por %p337, %p338
      %p340 = scmp.ne.s32.totalorder %s329, %s332
      %p341 = scmp.eq.s32.totalorder %s26, 1
      %p342 = por %p340, %p341
      %p343 = scmp.ne.s32.totalorder %s332, %s333
      %p344 = scmp.eq.s32.totalorder %s26, 0
      %p345 = por %p343, %p344
      %p346 = scmp.ne.s32.totalorder %s332, %s333
      %p347 = scmp.eq.s32.totalorder %s27, 1
      %p348 = por %p346, %p347
      %p350 = scmp.ne.s32.totalorder %s333, %s349
      %p351 = scmp.eq.s32.totalorder %s27, 0
      %p352 = por %p350, %p351
      %s353 = ssub.s32 %s29, %s36
      %p354 = scmp.eq.s32.totalorder %s353, 0
      %s356 = sadd.s32 %s355, 1
      %s357 = scalar_select %p354, %s355, %s356
      %p360 = pneg %p354
      %p361 = scmp.eq.s32.totalorder %s21, 1
      %p362 = por %p360, %p361
      %p363 = scmp.ne.s32.totalorder %s355, %s358
      %p364 = scmp.eq.s32.totalorder %s21, 0
      %p365 = por %p363, %p364
      %p366 = scmp.ne.s32.totalorder %s355, %s358
      %p367 = scmp.eq.s32.totalorder %s26, 1
      %p368 = por %p366, %p367
      %p369 = scmp.ne.s32.totalorder %s358, %s359
      %p370 = scmp.eq.s32.totalorder %s26, 0
      %p371 = por %p369, %p370
      %p372 = scmp.ne.s32.totalorder %s358, %s359
      %p373 = scmp.eq.s32.totalorder %s27, 1
      %p374 = por %p372, %p373
      %p376 = scmp.ne.s32.totalorder %s359, %s375
      %p377 = scmp.eq.s32.totalorder %s27, 0
      %p378 = por %p376, %p377
      %s379 = ssub.s32 %s29, %s36
      %p380 = scmp.eq.s32.totalorder %s379, 0
      %s382 = sadd.s32 %s381, 1
      %s383 = scalar_select %p380, %s381, %s382
      %p386 = pneg %p380
      %p387 = scmp.eq.s32.totalorder %s21, 1
      %p388 = por %p386, %p387
      %p389 = scmp.ne.s32.totalorder %s381, %s384
      %p390 = scmp.eq.s32.totalorder %s21, 0
      %p391 = por %p389, %p390
      %p392 = scmp.ne.s32.totalorder %s381, %s384
      %p393 = scmp.eq.s32.totalorder %s26, 1
      %p394 = por %p392, %p393
      %p395 = scmp.ne.s32.totalorder %s384, %s385
      %p396 = scmp.eq.s32.totalorder %s26, 0
      %p397 = por %p395, %p396
      %p398 = scmp.ne.s32.totalorder %s384, %s385
      %p399 = scmp.eq.s32.totalorder %s27, 1
      %p400 = por %p398, %p399
      %p402 = scmp.ne.s32.totalorder %s385, %s401
      %p403 = scmp.eq.s32.totalorder %s27, 0
      %p404 = por %p402, %p403
      %s405 = ssub.s32 %s28, %s40
      %p406 = scmp.eq.s32.totalorder %s405, 0
      %s408 = sadd.s32 %s407, 1
      %s409 = scalar_select %p406, %s407, %s408
      %p412 = pneg %p406
      %p413 = scmp.eq.s32.totalorder %s21, 1
      %p414 = por %p412, %p413
      %p415 = scmp.ne.s32.totalorder %s407, %s410
      %p416 = scmp.eq.s32.totalorder %s21, 0
      %p417 = por %p415, %p416
      %p418 = scmp.ne.s32.totalorder %s407, %s410
      %p419 = scmp.eq.s32.totalorder %s26, 1
      %p420 = por %p418, %p419
      %p421 = scmp.ne.s32.totalorder %s410, %s411
      %p422 = scmp.eq.s32.totalorder %s26, 0
      %p423 = por %p421, %p422
      %p424 = scmp.ne.s32.totalorder %s410, %s411
      %p425 = scmp.eq.s32.totalorder %s27, 1
      %p426 = por %p424, %p425
      %p428 = scmp.ne.s32.totalorder %s411, %s427
      %p429 = scmp.eq.s32.totalorder %s27, 0
      %p430 = por %p428, %p429
      %p431 = scmp.le.s32.totalorder 1, %s21
      %p432 = scmp.lt.s32.totalorder %s21, 3
      %p433 = pnand %p431, %p432
      %p434 = pneg %p433
      // Predicated region
      $region9: #{tpu_custom_call.1} parent=5 // pred_check
        _
      $region10: #{tpu_custom_call.1} parent=5 // pred_check_branch
        %436 = sbr.rel (%p433) target = $region12
      $region11: #{tpu_custom_call.1} parent=5 // pred_region
        %s437 = ssub.s32 %s21, 1
        // Predicated region
        $region13: #{tpu_custom_call.1} parent=11 // pred_check
          %p438 = pneg %p59
        $region14: #{tpu_custom_call.1} parent=11 // pred_check_branch
          %440 = sbr.rel (%p438) target = $region16
        $region15: #{tpu_custom_call.1} parent=11 // pred_region
          %s441 = smul.u32 2, %s30
          %p442 = scmp.lt.s32.totalorder %s441, 1
          %s443 = scalar_select %p442, %s441, 1
          %s444 = smul.addr %s443, 8
          %s445 = scalar_lea.vmem %s0, %s444
          %s446 = smul.u32 2, %s30
        $region16: #{tpu_custom_call.1} parent=11 // pred_fallthru
          _
        // Predicated region
        $region17: #{tpu_custom_call.1} parent=11 // pred_check
          %p447 = pneg %p85
        $region18: #{tpu_custom_call.1} parent=11 // pred_check_branch
          %449 = sbr.rel (%p447) target = $region20
        $region19: #{tpu_custom_call.1} parent=11 // pred_region
          %s450 = smul.u32 2, %s30
          %p451 = scmp.lt.s32.totalorder %s450, 1
          %s452 = scalar_select %p451, %s450, 1
          %s453 = smul.addr %s452, 8
          %s454 = scalar_lea.vmem %s1, %s453
          %s455 = smul.u32 2, %s30
        $region20: #{tpu_custom_call.1} parent=11 // pred_fallthru
          _
      $region12: #{tpu_custom_call.1} parent=5 // pred_fallthru
        _
      %p456 = scmp.lt.s32.totalorder %s21, 2
      // Predicated region
      $region21: #{tpu_custom_call.1} parent=5 // pred_check
        %p457 = pneg %p456
      $region22: #{tpu_custom_call.1} parent=5 // pred_check_branch
        %459 = sbr.rel (%p457) target = $region24
      $region23: #{tpu_custom_call.1} parent=5 // pred_region
        // Predicated region
        $region25: #{tpu_custom_call.1} parent=23 // pred_check
          %p460 = pneg %p105
        $region26: #{tpu_custom_call.1} parent=23 // pred_check_branch
          %462 = sbr.rel (%p460) target = $region28
        $region27: #{tpu_custom_call.1} parent=23 // pred_region
          %p463 = scmp.lt.s32.totalorder %s29, 1
          %s464 = scalar_select %p463, %s29, 1
          %s465 = scalar_lea.vmem %s2, %s464
        $region28: #{tpu_custom_call.1} parent=23 // pred_fallthru
          _
        // Predicated region
        $region29: #{tpu_custom_call.1} parent=23 // pred_check
          %p466 = pneg %p131
        $region30: #{tpu_custom_call.1} parent=23 // pred_check_branch
          %468 = sbr.rel (%p466) target = $region32
        $region31: #{tpu_custom_call.1} parent=23 // pred_region
          %p469 = scmp.lt.s32.totalorder %s29, 1
          %s470 = scalar_select %p469, %s29, 1
          %s471 = scalar_lea.vmem %s3, %s470
        $region32: #{tpu_custom_call.1} parent=23 // pred_fallthru
          _
        // Predicated region
        $region33: #{tpu_custom_call.1} parent=23 // pred_check
          %p472 = pneg %p157
        $region34: #{tpu_custom_call.1} parent=23 // pred_check_branch
          %474 = sbr.rel (%p472) target = $region36
        $region35: #{tpu_custom_call.1} parent=23 // pred_region
          %p475 = scmp.lt.s32.totalorder %s29, 1
          %s476 = scalar_select %p475, %s29, 1
          %s477 = smul.addr %s476, 4
          %s478 = smul.addr %s477, 4
          %s479 = scalar_lea.vmem %s4, %s478
        $region36: #{tpu_custom_call.1} parent=23 // pred_fallthru
          _
        // Predicated region
        $region37: #{tpu_custom_call.1} parent=23 // pred_check
          %p480 = pneg %p183
        $region38: #{tpu_custom_call.1} parent=23 // pred_check_branch
          %482 = sbr.rel (%p480) target = $region40
        $region39: #{tpu_custom_call.1} parent=23 // pred_region
          %p483 = scmp.lt.s32.totalorder %s29, 1
          %s484 = scalar_select %p483, %s29, 1
          %s485 = scalar_lea.vmem %s5, %s484
        $region40: #{tpu_custom_call.1} parent=23 // pred_fallthru
          _
        // Predicated region
        $region41: #{tpu_custom_call.1} parent=23 // pred_check
          %p486 = pneg %p209
        $region42: #{tpu_custom_call.1} parent=23 // pred_check_branch
          %488 = sbr.rel (%p486) target = $region44
        $region43: #{tpu_custom_call.1} parent=23 // pred_region
          %p489 = scmp.lt.s32.totalorder %s29, 1
          %s490 = scalar_select %p489, %s29, 1
          %s491 = smul.addr %s490, 4
          %s492 = smul.addr %s491, 4
          %s493 = scalar_lea.vmem %s6, %s492
        $region44: #{tpu_custom_call.1} parent=23 // pred_fallthru
          _
        // Predicated region
        $region45: #{tpu_custom_call.1} parent=23 // pred_check
          %p494 = pneg %p235
        $region46: #{tpu_custom_call.1} parent=23 // pred_check_branch
          %496 = sbr.rel (%p494) target = $region48
        $region47: #{tpu_custom_call.1} parent=23 // pred_region
          %p497 = scmp.lt.s32.totalorder %s29, 1
          %s498 = scalar_select %p497, %s29, 1
          %s499 = scalar_lea.vmem %s7, %s498
        $region48: #{tpu_custom_call.1} parent=23 // pred_fallthru
          _
        // Predicated region
        $region49: #{tpu_custom_call.1} parent=23 // pred_check
          %p500 = pneg %p261
        $region50: #{tpu_custom_call.1} parent=23 // pred_check_branch
          %502 = sbr.rel (%p500) target = $region52
        $region51: #{tpu_custom_call.1} parent=23 // pred_region
          %p503 = scmp.lt.s32.totalorder %s29, 1
          %s504 = scalar_select %p503, %s29, 1
          %s505 = scalar_lea.vmem %s8, %s504
        $region52: #{tpu_custom_call.1} parent=23 // pred_fallthru
          _
        // Predicated region
        $region53: #{tpu_custom_call.1} parent=23 // pred_check
          %p506 = pneg %p287
        $region54: #{tpu_custom_call.1} parent=23 // pred_check_branch
          %508 = sbr.rel (%p506) target = $region56
        $region55: #{tpu_custom_call.1} parent=23 // pred_region
          %p509 = scmp.lt.s32.totalorder %s29, 1
          %s510 = scalar_select %p509, %s29, 1
          %s511 = scalar_lea.vmem %s9, %s510
        $region56: #{tpu_custom_call.1} parent=23 // pred_fallthru
          _
        // Predicated region
        $region57: #{tpu_custom_call.1} parent=23 // pred_check
          %p512 = pneg %p313
        $region58: #{tpu_custom_call.1} parent=23 // pred_check_branch
          %514 = sbr.rel (%p512) target = $region60
        $region59: #{tpu_custom_call.1} parent=23 // pred_region
          %p515 = scmp.lt.s32.totalorder %s29, 1
          %s516 = scalar_select %p515, %s29, 1
          %s517 = smul.addr %s516, 4
          %s518 = smul.addr %s517, 4
          %s519 = scalar_lea.vmem %s10, %s518
        $region60: #{tpu_custom_call.1} parent=23 // pred_fallthru
          _
        // Predicated region
        $region61: #{tpu_custom_call.1} parent=23 // pred_check
          %p520 = pneg %p339
        $region62: #{tpu_custom_call.1} parent=23 // pred_check_branch
          %522 = sbr.rel (%p520) target = $region64
        $region63: #{tpu_custom_call.1} parent=23 // pred_region
          %p523 = scmp.lt.s32.totalorder %s29, 1
          %s524 = scalar_select %p523, %s29, 1
          %s525 = scalar_lea.vmem %s11, %s524
        $region64: #{tpu_custom_call.1} parent=23 // pred_fallthru
          _
        // Predicated region
        $region65: #{tpu_custom_call.1} parent=23 // pred_check
          %p526 = pneg %p365
        $region66: #{tpu_custom_call.1} parent=23 // pred_check_branch
          %528 = sbr.rel (%p526) target = $region68
        $region67: #{tpu_custom_call.1} parent=23 // pred_region
          %p529 = scmp.lt.s32.totalorder %s29, 1
          %s530 = scalar_select %p529, %s29, 1
          %s531 = smul.addr %s530, 16
          %s532 = smul.addr %s531, 4
          %s533 = scalar_lea.vmem %s12, %s532
        $region68: #{tpu_custom_call.1} parent=23 // pred_fallthru
          _
        // Predicated region
        $region69: #{tpu_custom_call.1} parent=23 // pred_check
          %p534 = pneg %p391
        $region70: #{tpu_custom_call.1} parent=23 // pred_check_branch
          %536 = sbr.rel (%p534) target = $region72
        $region71: #{tpu_custom_call.1} parent=23 // pred_region
          %p537 = scmp.lt.s32.totalorder %s29, 1
          %s538 = scalar_select %p537, %s29, 1
          %s539 = scalar_lea.vmem %s13, %s538
        $region72: #{tpu_custom_call.1} parent=23 // pred_fallthru
          _
      $region24: #{tpu_custom_call.1} parent=5 // pred_fallthru
        _
      %p540 = scmp.le.s32.totalorder 1, %s21
      %p541 = scmp.lt.s32.totalorder %s21, 3
      %p542 = pnand %p540, %p541
      %p543 = pneg %p542
      // Predicated region
      $region73: #{tpu_custom_call.1} parent=5 // pred_check
        _
      $region74: #{tpu_custom_call.1} parent=5 // pred_check_branch
        %545 = sbr.rel (%p542) target = $region76
      $region75: #{tpu_custom_call.1} parent=5 // pred_region
        %s546 = ssub.s32 %s21, 1
        %s547 = smul.u32 2, %s30
        %p548 = scmp.lt.s32.totalorder %s547, 1
        %s549 = scalar_select %p548, %s547, 1
        %s550 = smul.addr %s549, 8
        %s551 = scalar_lea.vmem %s0, %s550
        %p552 = pneg %p59
        %p553 = pneg %p56
        %s554 = smul.u32 2, %s30
        %p555 = scmp.lt.s32.totalorder %s554, 1
        %s556 = scalar_select %p555, %s554, 1
        %s557 = smul.addr %s556, 8
        %s558 = scalar_lea.vmem %s1, %s557
        %p559 = pneg %p85
        %p560 = pneg %p82
        %p561 = scmp.lt.s32.totalorder %s31, 1
        %s562 = scalar_select %p561, %s31, 1
        %s563 = scalar_lea.vmem %s2, %s562
        %p564 = pneg %p111
        %p565 = pneg %p108
        %p566 = scmp.lt.s32.totalorder %s31, 1
        %s567 = scalar_select %p566, %s31, 1
        %s568 = scalar_lea.vmem %s3, %s567
        %p569 = pneg %p137
        %p570 = pneg %p134
        %p571 = scmp.lt.s32.totalorder %s31, 1
        %s572 = scalar_select %p571, %s31, 1
        %s573 = smul.addr %s572, 4
        %s574 = smul.addr %s573, 4
        %s575 = scalar_lea.vmem %s4, %s574
        %p576 = pneg %p163
        %p577 = pneg %p160
        %p578 = scmp.lt.s32.totalorder %s31, 1
        %s579 = scalar_select %p578, %s31, 1
        %s580 = scalar_lea.vmem %s5, %s579
        %p581 = pneg %p189
        %p582 = pneg %p186
        %p583 = scmp.lt.s32.totalorder %s31, 1
        %s584 = scalar_select %p583, %s31, 1
        %s585 = smul.addr %s584, 4
        %s586 = smul.addr %s585, 4
        %s587 = scalar_lea.vmem %s6, %s586
        %p588 = pneg %p215
        %p589 = pneg %p212
        %p590 = scmp.lt.s32.totalorder %s31, 1
        %s591 = scalar_select %p590, %s31, 1
        %s592 = scalar_lea.vmem %s7, %s591
        %p593 = pneg %p241
        %p594 = pneg %p238
        %p595 = scmp.lt.s32.totalorder %s31, 1
        %s596 = scalar_select %p595, %s31, 1
        %s597 = scalar_lea.vmem %s8, %s596
        %p598 = pneg %p267
        %p599 = pneg %p264
        %p600 = scmp.lt.s32.totalorder %s31, 1
        %s601 = scalar_select %p600, %s31, 1
        %s602 = scalar_lea.vmem %s9, %s601
        %p603 = pneg %p293
        %p604 = pneg %p290
        %p605 = scmp.lt.s32.totalorder %s31, 1
        %s606 = scalar_select %p605, %s31, 1
        %s607 = smul.addr %s606, 4
        %s608 = smul.addr %s607, 4
        %s609 = scalar_lea.vmem %s10, %s608
        %p610 = pneg %p319
        %p611 = pneg %p316
        %p612 = scmp.lt.s32.totalorder %s31, 1
        %s613 = scalar_select %p612, %s31, 1
        %s614 = scalar_lea.vmem %s11, %s613
        %p615 = pneg %p345
        %p616 = pneg %p342
        %p617 = scmp.lt.s32.totalorder %s31, 1
        %s618 = scalar_select %p617, %s31, 1
        %s619 = smul.addr %s618, 16
        %s620 = smul.addr %s619, 4
        %s621 = scalar_lea.vmem %s12, %s620
        %p622 = pneg %p371
        %p623 = pneg %p368
        %p624 = scmp.lt.s32.totalorder %s31, 1
        %s625 = scalar_select %p624, %s31, 1
        %s626 = scalar_lea.vmem %s13, %s625
        %p627 = pneg %p397
        %p628 = pneg %p394
        %p629 = pneg %p423
        %p630 = pneg %p420
        %s631 = smul.u32 2, %s30
        %p632 = scmp.lt.s32.totalorder %s631, 1
        %s633 = scalar_select %p632, %s631, 1
        %s634 = smul.addr %s633, 8
        %s635 = scalar_lea.vmem %s0, %s634
        %s636 = smul.u32 2, %s30
        %s637 = smul.u32 2, %s30
        %p638 = scmp.lt.s32.totalorder %s637, 1
        %s639 = scalar_select %p638, %s637, 1
        %s640 = smul.addr %s639, 8
        %s641 = scalar_lea.vmem %s1, %s640
        %s642 = smul.u32 2, %s30
        %p643 = scmp.lt.s32.totalorder %s31, 1
        %s644 = scalar_select %p643, %s31, 1
        %s645 = scalar_lea.vmem %s2, %s644
        %p646 = scmp.lt.s32.totalorder %s31, 1
        %s647 = scalar_select %p646, %s31, 1
        %s648 = scalar_lea.vmem %s3, %s647
        %p649 = scmp.lt.s32.totalorder %s31, 1
        %s650 = scalar_select %p649, %s31, 1
        %s651 = smul.addr %s650, 4
        %s652 = smul.addr %s651, 4
        %s653 = scalar_lea.vmem %s4, %s652
        %p654 = scmp.lt.s32.totalorder %s31, 1
        %s655 = scalar_select %p654, %s31, 1
        %s656 = scalar_lea.vmem %s5, %s655
        %p657 = scmp.lt.s32.totalorder %s31, 1
        %s658 = scalar_select %p657, %s31, 1
        %s659 = smul.addr %s658, 4
        %s660 = smul.addr %s659, 4
        %s661 = scalar_lea.vmem %s6, %s660
        %p662 = scmp.lt.s32.totalorder %s31, 1
        %s663 = scalar_select %p662, %s31, 1
        %s664 = scalar_lea.vmem %s7, %s663
        %p665 = scmp.lt.s32.totalorder %s31, 1
        %s666 = scalar_select %p665, %s31, 1
        %s667 = scalar_lea.vmem %s8, %s666
        %p668 = scmp.lt.s32.totalorder %s31, 1
        %s669 = scalar_select %p668, %s31, 1
        %s670 = scalar_lea.vmem %s9, %s669
        %p671 = scmp.lt.s32.totalorder %s31, 1
        %s672 = scalar_select %p671, %s31, 1
        %s673 = smul.addr %s672, 4
        %s674 = smul.addr %s673, 4
        %s675 = scalar_lea.vmem %s10, %s674
        %p676 = scmp.lt.s32.totalorder %s31, 1
        %s677 = scalar_select %p676, %s31, 1
        %s678 = scalar_lea.vmem %s11, %s677
        %p679 = scmp.lt.s32.totalorder %s31, 1
        %s680 = scalar_select %p679, %s31, 1
        %s681 = smul.addr %s680, 16
        %s682 = smul.addr %s681, 4
        %s683 = scalar_lea.vmem %s12, %s682
        %p684 = scmp.lt.s32.totalorder %s31, 1
        %s685 = scalar_select %p684, %s31, 1
        %s686 = scalar_lea.vmem %s13, %s685
        %s687 = smul.u32 2, %s30
        %p689 = scmp.eq.s32.totalorder %s31, 0
        // Predicated region
        $region77: #{tpu_custom_call.1} parent=75 // pred_check
          %p690 = pneg %p689
        $region78: #{tpu_custom_call.1} parent=75 // pred_check_branch
          %692 = sbr.rel (%p690) target = $region80
        $region79: #{tpu_custom_call.1} parent=75 // pred_region
          %v693 = vld [vmem:[%s635] sm:$0xff]
          %v694 = vld [vmem:[%s635 + $0x8] sm:$0xff]
          %vm695 = vcmask 261120
          %696 = vst.msk [vmem:[#allocation2] sm:$0xff] %vm695, %v693
          %697 = vst.msk [vmem:[#allocation2 + $0x8] sm:$0xff] %vm695, %v694
        $region80: #{tpu_custom_call.1} parent=75 // pred_fallthru
          _
        %v698 = vld [vmem:[#allocation2] sm:$0xff]
        %v699 = vld [vmem:[#allocation2 + $0x8] sm:$0xff]
        %v700 = vld [vmem:[%s641] sm:$0xff]
        %v701 = vld [vmem:[%s641 + $0x8] sm:$0xff]
        %v702 = vld [vmem:[%s645] sm:$0x1]
        %v703 = vld [vmem:[%s648] sm:$0x1]
        %vm704 = vcmask 261120
        %v705 = vsel %vm704, %v698, 0.0
        %706 = vadd.xlane.f32.xlu0 %v705
        %v707 = vpop.xlane.xlu0 %706
        %v708 = vsel %vm704, %v699, 0.0
        %709 = vadd.xlane.f32.xlu0 %v708
        %v710 = vpop.xlane.xlu0 %709
        %v711 = vrcp.pop 32.0
        %v712 = vmul.f32 32.0, %v711
        %v713 = vsub.f32 1.0, %v712
        %v714 = vmul.f32 %v711, %v713
        %v715 = vadd.f32 %v711, %v714
        %vm716 = vweird.f32 %v711
        %v717 = vsel %vm716, %v711, %v715
        %v718 = vmul.f32 %v707, %v717
        %v719 = vmul.f32 %v710, %v717
        %v720 = vsub.f32 %v698, %v718
        %v721 = vsub.f32 %v699, %v719
        %v722 = vmul.f32 %v720, %v720
        %v723 = vmul.f32 %v721, %v721
        %v724 = vsel %vm704, %v722, 0.0
        %725 = vadd.xlane.f32.xlu0 %v724
        %v726 = vpop.xlane.xlu0 %725
        %v727 = vsel %vm704, %v723, 0.0
        %728 = vadd.xlane.f32.xlu0 %v727
        %v729 = vpop.xlane.xlu0 %728
        %v730 = vmul.f32 %v726, %v717
        %v731 = vmul.f32 %v729, %v717
        %v732 = vadd.f32 %v730, 1e-05
        %v733 = vadd.f32 %v731, 1e-05
        %v734 = vrsqrt.pop %v732
        %v735 = vmul.f32 %v734, %v732
        %v736 = vmul.f32 %v735, %v734
        %v737 = vmul.f32 0.5, %v736
        %v738 = vsub.f32 1.5, %v737
        %v739 = vmul.f32 %v734, %v738
        %vm740 = vweird.f32 %v732
        %vm741 = vweird.f32 %v734
        %vm742 = vmor %vm740, %vm741
        %v743 = vsel %vm742, %v734, %v739
        %v744 = vrsqrt.pop %v733
        %v745 = vmul.f32 %v744, %v733
        %v746 = vmul.f32 %v745, %v744
        %v747 = vmul.f32 0.5, %v746
        %v748 = vsub.f32 1.5, %v747
        %v749 = vmul.f32 %v744, %v748
        %vm750 = vweird.f32 %v733
        %vm751 = vweird.f32 %v744
        %vm752 = vmor %vm750, %vm751
        %v753 = vsel %vm752, %v744, %v749
        %v754 = vmul.f32 %v720, %v743
        %v755 = vmul.f32 %v721, %v753
        %v757 = vperm.slane %v702, 0
        %v759 = vmul.f32 %v754, %v757
        %v760 = vmul.f32 %v755, %v757
        %v762 = vperm.slane %v703, 0
        %v764 = vadd.f32 %v759, %v762
        %v765 = vadd.f32 %v760, %v762
        %v766 = vpack.c.bf16 %v765, %v764
        %v767 = vld [vmem:[%s653] sm:$0xf]
        %v768 = vld [vmem:[%s653 + $0x4] sm:$0xf]
        %v769 = vld [vmem:[%s653 + $0x8] sm:$0xf]
        %v770 = vld [vmem:[%s653 + $0xc] sm:$0xf]
        %v771 = vld [vmem:[%s656] sm:$0x1]
        %v773 = vperm.slane %v771, 0
        %v779 = vunpack.c.l.b16 %v767
        %v780 = vunpack.c.l.b16 %v768
        %v781 = vunpack.c.l.b16 %v769
        %v782 = vunpack.c.l.b16 %v770
        %v783 = vpack.c.b16 %v780, %v779
        %v784 = vpack.c.b16 %v782, %v781
        %v788 = vsel %vm704, %v766, 0
        %790 = vmatpush.bf16.msra.mxu0 0
        %791 = vmatpush.bf16.msra.mxu0 0
        %792 = vmatpush.bf16.msra.mxu0 0
        %793 = vmatpush.bf16.msra.mxu0 0
        %794 = vmatpush.bf16.msra.mxu0 0
        %795 = vmatpush.bf16.msra.mxu0 0
        %796 = vmatpush.bf16.msra.mxu0 %v784
        %797 = vmatpush.bf16.msra.mxu0 %v783
        %798 = vmatmul.bf16.gmra.mxu0 %v788
        %v799 = vpop.f32.mrf.mxu0
        %v800 = vadd.f32 %v773, %v799
        %v801 = vpop.f32.mrf.mxu0
        %v802 = vadd.f32 %v773, %v801
        %803 = vdwg.mxu0
        %804 = vxpose.xlu0.b32.start [1/16] %v800, 128
        %805 = vxpose.xlu0.b32.cont [2/16] %v802, 128
        %806 = vxpose.xlu0.b32.cont [3/16] 0.0, 128
        %807 = vxpose.xlu0.b32.cont [4/16] 0.0, 128
        %808 = vxpose.xlu0.b32.cont [5/16] 0.0, 128
        %809 = vxpose.xlu0.b32.cont [6/16] 0.0, 128
        %810 = vxpose.xlu0.b32.cont [7/16] 0.0, 128
        %811 = vxpose.xlu0.b32.cont [8/16] 0.0, 128
        %812 = vxpose.xlu0.b32.cont [9/16] 0.0, 128
        %813 = vxpose.xlu0.b32.cont [10/16] 0.0, 128
        %814 = vxpose.xlu0.b32.cont [11/16] 0.0, 128
        %815 = vxpose.xlu0.b32.cont [12/16] 0.0, 128
        %816 = vxpose.xlu0.b32.cont [13/16] 0.0, 128
        %817 = vxpose.xlu0.b32.cont [14/16] 0.0, 128
        %818 = vxpose.xlu0.b32.cont [15/16] 0.0, 128
        %819 = vxpose.xlu0.b32.end [16/16] 0.0, 128
        %v820 = vpop.trf.xlu0
        %v821 = vpop.trf.xlu0
        %v822 = vpop.trf.xlu0
        %v823 = vpop.trf.xlu0
        %v824 = vpop.trf.xlu0
        %v825 = vpop.trf.xlu0
        %v826 = vpop.trf.xlu0
        %v827 = vpop.trf.xlu0
        %v828 = vpop.trf.xlu0
        %v829 = vpop.trf.xlu0
        %v830 = vpop.trf.xlu0
        %v831 = vpop.trf.xlu0
        %v832 = vpop.trf.xlu0
        %v833 = vpop.trf.xlu0
        %v834 = vpop.trf.xlu0
        %v835 = vpop.trf.xlu0
        %836 = vxpose.xlu0.b32.start [1/16] %v820, 128
        %837 = vxpose.xlu0.b32.cont [2/16] 0.0, 128
        %838 = vxpose.xlu0.b32.cont [3/16] 0.0, 128
        %839 = vxpose.xlu0.b32.cont [4/16] 0.0, 128
        %840 = vxpose.xlu0.b32.cont [5/16] 0.0, 128
        %841 = vxpose.xlu0.b32.cont [6/16] 0.0, 128
        %842 = vxpose.xlu0.b32.cont [7/16] 0.0, 128
        %843 = vxpose.xlu0.b32.cont [8/16] 0.0, 128
        %844 = vxpose.xlu0.b32.cont [9/16] 0.0, 128
        %845 = vxpose.xlu0.b32.cont [10/16] 0.0, 128
        %846 = vxpose.xlu0.b32.cont [11/16] 0.0, 128
        %847 = vxpose.xlu0.b32.cont [12/16] 0.0, 128
        %848 = vxpose.xlu0.b32.cont [13/16] 0.0, 128
        %849 = vxpose.xlu0.b32.cont [14/16] 0.0, 128
        %850 = vxpose.xlu0.b32.cont [15/16] 0.0, 128
        %851 = vxpose.xlu0.b32.end [16/16] 0.0, 128
        %v852 = vpop.trf.xlu0
        %v853 = vpop.trf.xlu0
        %v854 = vpop.trf.xlu0
        %v855 = vpop.trf.xlu0
        %v856 = vpop.trf.xlu0
        %v857 = vpop.trf.xlu0
        %v858 = vpop.trf.xlu0
        %v859 = vpop.trf.xlu0
        %v860 = vpop.trf.xlu0
        %v861 = vpop.trf.xlu0
        %v862 = vpop.trf.xlu0
        %v863 = vpop.trf.xlu0
        %v864 = vpop.trf.xlu0
        %v865 = vpop.trf.xlu0
        %v866 = vpop.trf.xlu0
        %v867 = vpop.trf.xlu0
        %868 = vxpose.xlu0.b32.start [1/16] %v821, 128
        %869 = vxpose.xlu0.b32.cont [2/16] 0.0, 128
        %870 = vxpose.xlu0.b32.cont [3/16] 0.0, 128
        %871 = vxpose.xlu0.b32.cont [4/16] 0.0, 128
        %872 = vxpose.xlu0.b32.cont [5/16] 0.0, 128
        %873 = vxpose.xlu0.b32.cont [6/16] 0.0, 128
        %874 = vxpose.xlu0.b32.cont [7/16] 0.0, 128
        %875 = vxpose.xlu0.b32.cont [8/16] 0.0, 128
        %876 = vxpose.xlu0.b32.cont [9/16] 0.0, 128
        %877 = vxpose.xlu0.b32.cont [10/16] 0.0, 128
        %878 = vxpose.xlu0.b32.cont [11/16] 0.0, 128
        %879 = vxpose.xlu0.b32.cont [12/16] 0.0, 128
        %880 = vxpose.xlu0.b32.cont [13/16] 0.0, 128
        %881 = vxpose.xlu0.b32.cont [14/16] 0.0, 128
        %882 = vxpose.xlu0.b32.cont [15/16] 0.0, 128
        %883 = vxpose.xlu0.b32.end [16/16] 0.0, 128
        %v884 = vpop.trf.xlu0
        %v885 = vpop.trf.xlu0
        %v886 = vpop.trf.xlu0
        %v887 = vpop.trf.xlu0
        %v888 = vpop.trf.xlu0
        %v889 = vpop.trf.xlu0
        %v890 = vpop.trf.xlu0
        %v891 = vpop.trf.xlu0
        %v892 = vpop.trf.xlu0
        %v893 = vpop.trf.xlu0
        %v894 = vpop.trf.xlu0
        %v895 = vpop.trf.xlu0
        %v896 = vpop.trf.xlu0
        %v897 = vpop.trf.xlu0
        %v898 = vpop.trf.xlu0
        %v899 = vpop.trf.xlu0
        %900 = vxpose.xlu0.b32.start [1/16] %v822, 128
        %901 = vxpose.xlu0.b32.cont [2/16] 0.0, 128
        %902 = vxpose.xlu0.b32.cont [3/16] 0.0, 128
        %903 = vxpose.xlu0.b32.cont [4/16] 0.0, 128
        %904 = vxpose.xlu0.b32.cont [5/16] 0.0, 128
        %905 = vxpose.xlu0.b32.cont [6/16] 0.0, 128
        %906 = vxpose.xlu0.b32.cont [7/16] 0.0, 128
        %907 = vxpose.xlu0.b32.cont [8/16] 0.0, 128
        %908 = vxpose.xlu0.b32.cont [9/16] 0.0, 128
        %909 = vxpose.xlu0.b32.cont [10/16] 0.0, 128
        %910 = vxpose.xlu0.b32.cont [11/16] 0.0, 128
        %911 = vxpose.xlu0.b32.cont [12/16] 0.0, 128
        %912 = vxpose.xlu0.b32.cont [13/16] 0.0, 128
        %913 = vxpose.xlu0.b32.cont [14/16] 0.0, 128
        %914 = vxpose.xlu0.b32.cont [15/16] 0.0, 128
        %915 = vxpose.xlu0.b32.end [16/16] 0.0, 128
        %v916 = vpop.trf.xlu0
        %v917 = vpop.trf.xlu0
        %v918 = vpop.trf.xlu0
        %v919 = vpop.trf.xlu0
        %v920 = vpop.trf.xlu0
        %v921 = vpop.trf.xlu0
        %v922 = vpop.trf.xlu0
        %v923 = vpop.trf.xlu0
        %v924 = vpop.trf.xlu0
        %v925 = vpop.trf.xlu0
        %v926 = vpop.trf.xlu0
        %v927 = vpop.trf.xlu0
        %v928 = vpop.trf.xlu0
        %v929 = vpop.trf.xlu0
        %v930 = vpop.trf.xlu0
        %v931 = vpop.trf.xlu0
        %932 = vxpose.xlu0.b32.start [1/16] %v823, 128
        %933 = vxpose.xlu0.b32.cont [2/16] 0.0, 128
        %934 = vxpose.xlu0.b32.cont [3/16] 0.0, 128
        %935 = vxpose.xlu0.b32.cont [4/16] 0.0, 128
        %936 = vxpose.xlu0.b32.cont [5/16] 0.0, 128
        %937 = vxpose.xlu0.b32.cont [6/16] 0.0, 128
        %938 = vxpose.xlu0.b32.cont [7/16] 0.0, 128
        %939 = vxpose.xlu0.b32.cont [8/16] 0.0, 128
        %940 = vxpose.xlu0.b32.cont [9/16] 0.0, 128
        %941 = vxpose.xlu0.b32.cont [10/16] 0.0, 128
        %942 = vxpose.xlu0.b32.cont [11/16] 0.0, 128
        %943 = vxpose.xlu0.b32.cont [12/16] 0.0, 128
        %944 = vxpose.xlu0.b32.cont [13/16] 0.0, 128
        %945 = vxpose.xlu0.b32.cont [14/16] 0.0, 128
        %946 = vxpose.xlu0.b32.cont [15/16] 0.0, 128
        %947 = vxpose.xlu0.b32.end [16/16] 0.0, 128
        %v948 = vpop.trf.xlu0
        %v949 = vpop.trf.xlu0
        %v950 = vpop.trf.xlu0
        %v951 = vpop.trf.xlu0
        %v952 = vpop.trf.xlu0
        %v953 = vpop.trf.xlu0
        %v954 = vpop.trf.xlu0
        %v955 = vpop.trf.xlu0
        %v956 = vpop.trf.xlu0
        %v957 = vpop.trf.xlu0
        %v958 = vpop.trf.xlu0
        %v959 = vpop.trf.xlu0
        %v960 = vpop.trf.xlu0
        %v961 = vpop.trf.xlu0
        %v962 = vpop.trf.xlu0
        %v963 = vpop.trf.xlu0
        %v964 = vld [vmem:[%s661] sm:$0xf]
        %v965 = vld [vmem:[%s661 + $0x4] sm:$0xf]
        %v966 = vld [vmem:[%s661 + $0x8] sm:$0xf]
        %v967 = vld [vmem:[%s661 + $0xc] sm:$0xf]
        %v968 = vpack.c.bf16 %v852, %v852
        %v969 = vpack.c.bf16 %v884, %v884
        %v970 = vpack.c.bf16 %v916, %v916
        %v971 = vpack.c.bf16 %v948, %v948
        %v972 = vpack.c.bf16 %v824, %v824
        %v973 = vpack.c.bf16 %v825, %v825
        %v974 = vpack.c.bf16 %v826, %v826
        %v975 = vpack.c.bf16 %v827, %v827
        %v976 = vpack.c.bf16 %v828, %v828
        %v977 = vpack.c.bf16 %v829, %v829
        %v978 = vpack.c.bf16 %v830, %v830
        %v979 = vpack.c.bf16 %v831, %v831
        %vm980 = vcmask 64512
        %v982 = vsel %vm980, %v968, 0
        %vm984 = vcmask 1043456
        %v986 = vsel %vm984, %v972, 0
        %988 = vmatpush.bf16.msra.mxu0 0
        %989 = vmatpush.bf16.msra.mxu0 0
        %990 = vmatpush.bf16.msra.mxu0 0
        %991 = vmatpush.bf16.msra.mxu0 0
        %992 = vmatpush.bf16.msra.mxu0 0
        %993 = vmatpush.bf16.msra.mxu0 0
        %994 = vmatpush.bf16.msra.mxu0 0
        %995 = vmatpush.bf16.msra.mxu0 %v986
        %996 = vmatmul.bf16.gmra.mxu0 %v982
        %v997 = vpop.f32.mrf.mxu0
        %v998 = vadd.f32 %v700, %v997
        %v999 = vpop.f32.mrf.mxu0
        %1000 = vdwg.mxu0
        %v1002 = vsel %vm980, %v969, 0
        %v1005 = vsel %vm984, %v973, 0
        %1007 = vmatpush.bf16.msra.mxu0 0
        %1008 = vmatpush.bf16.msra.mxu0 0
        %1009 = vmatpush.bf16.msra.mxu0 0
        %1010 = vmatpush.bf16.msra.mxu0 0
        %1011 = vmatpush.bf16.msra.mxu0 0
        %1012 = vmatpush.bf16.msra.mxu0 0
        %1013 = vmatpush.bf16.msra.mxu0 0
        %1014 = vmatpush.bf16.msra.mxu0 %v1005
        %1015 = vmatmul.bf16.gmra.mxu0 %v1002
        %v1016 = vpop.f32.mrf.mxu0
        %v1017 = vadd.f32 %v700, %v1016
        %v1018 = vpop.f32.mrf.mxu0
        %1019 = vdwg.mxu0
        %v1021 = vsel %vm980, %v970, 0
        %v1024 = vsel %vm984, %v974, 0
        %1026 = vmatpush.bf16.msra.mxu0 0
        %1027 = vmatpush.bf16.msra.mxu0 0
        %1028 = vmatpush.bf16.msra.mxu0 0
        %1029 = vmatpush.bf16.msra.mxu0 0
        %1030 = vmatpush.bf16.msra.mxu0 0
        %1031 = vmatpush.bf16.msra.mxu0 0
        %1032 = vmatpush.bf16.msra.mxu0 0
        %1033 = vmatpush.bf16.msra.mxu0 %v1024
        %1034 = vmatmul.bf16.gmra.mxu0 %v1021
        %v1035 = vpop.f32.mrf.mxu0
        %v1036 = vadd.f32 %v700, %v1035
        %v1037 = vpop.f32.mrf.mxu0
        %1038 = vdwg.mxu0
        %v1040 = vsel %vm980, %v971, 0
        %v1043 = vsel %vm984, %v975, 0
        %1045 = vmatpush.bf16.msra.mxu0 0
        %1046 = vmatpush.bf16.msra.mxu0 0
        %1047 = vmatpush.bf16.msra.mxu0 0
        %1048 = vmatpush.bf16.msra.mxu0 0
        %1049 = vmatpush.bf16.msra.mxu0 0
        %1050 = vmatpush.bf16.msra.mxu0 0
        %1051 = vmatpush.bf16.msra.mxu0 0
        %1052 = vmatpush.bf16.msra.mxu0 %v1043
        %1053 = vmatmul.bf16.gmra.mxu0 %v1040
        %v1054 = vpop.f32.mrf.mxu0
        %v1055 = vadd.f32 %v700, %v1054
        %v1056 = vpop.f32.mrf.mxu0
        %1057 = vdwg.mxu0
        %v1058 = vsel %vm980, %v998, -inf
        %1059 = vmax.xlane.f32.xlu0 %v1058
        %v1060 = vpop.xlane.xlu0 %1059
        %v1061 = vsel %vm980, %v1017, -inf
        %1062 = vmax.xlane.f32.xlu0 %v1061
        %v1063 = vpop.xlane.xlu0 %1062
        %v1064 = vsel %vm980, %v1036, -inf
        %1065 = vmax.xlane.f32.xlu0 %v1064
        %v1066 = vpop.xlane.xlu0 %1065
        %v1067 = vsel %vm980, %v1055, -inf
        %1068 = vmax.xlane.f32.xlu0 %v1067
        %v1069 = vpop.xlane.xlu0 %1068
        %v1070 = vsub.f32 %v998, %v1060
        %v1071 = vsub.f32 %v1017, %v1063
        %v1072 = vsub.f32 %v1036, %v1066
        %v1073 = vsub.f32 %v1055, %v1069
        %v1074 = vmul.f32 %v1070, 1.442695
        %v1075 = vpow.pop %v1074
        %v1076 = vmul.f32 %v1071, 1.442695
        %v1077 = vpow.pop %v1076
        %v1078 = vmul.f32 %v1072, 1.442695
        %v1079 = vpow.pop %v1078
        %v1080 = vmul.f32 %v1073, 1.442695
        %v1081 = vpow.pop %v1080
        %v1082 = vsel %vm980, %v1075, 0.0
        %1083 = vadd.xlane.f32.xlu0 %v1082
        %v1084 = vpop.xlane.xlu0 %1083
        %v1085 = vsel %vm980, %v1077, 0.0
        %1086 = vadd.xlane.f32.xlu0 %v1085
        %v1087 = vpop.xlane.xlu0 %1086
        %v1088 = vsel %vm980, %v1079, 0.0
        %1089 = vadd.xlane.f32.xlu0 %v1088
        %v1090 = vpop.xlane.xlu0 %1089
        %v1091 = vsel %vm980, %v1081, 0.0
        %1092 = vadd.xlane.f32.xlu0 %v1091
        %v1093 = vpop.xlane.xlu0 %1092
        %v1094 = vrcp.pop %v1084
        %v1095 = vrcp.pop %v1087
        %v1096 = vrcp.pop %v1090
        %v1097 = vrcp.pop %v1093
        %v1098 = vmul.f32 %v1075, %v1094
        %v1099 = vmul.f32 %v1077, %v1095
        %v1100 = vmul.f32 %v1079, %v1096
        %v1101 = vmul.f32 %v1081, %v1097
        %v1102 = vpack.c.bf16 %v1098, %v1098
        %v1103 = vpack.c.bf16 %v1099, %v1099
        %v1104 = vpack.c.bf16 %v1100, %v1100
        %v1105 = vpack.c.bf16 %v1101, %v1101
        %v1107 = vsel %vm980, %v1102, 0
        %v1110 = vsel %vm980, %v976, 0
        %1112 = vmatpush.bf16.xpose.msra.mxu0 0
        %1113 = vmatpush.bf16.xpose.msra.mxu0 0
        %1114 = vmatpush.bf16.xpose.msra.mxu0 0
        %1115 = vmatpush.bf16.xpose.msra.mxu0 0
        %1116 = vmatpush.bf16.xpose.msra.mxu0 0
        %1117 = vmatpush.bf16.xpose.msra.mxu0 0
        %1118 = vmatpush.bf16.xpose.msra.mxu0 0
        %1119 = vmatpush.bf16.xpose.msra.mxu0 %v1110
        %1120 = vmatmul.bf16.gmra.mxu0 %v1107
        %v1121 = vpop.f32.mrf.mxu0
        %v1122 = vadd.f32 0.0, %v1121
        %v1123 = vpop.f32.mrf.mxu0
        %1124 = vdwg.mxu0
        %v1126 = vsel %vm980, %v1103, 0
        %v1129 = vsel %vm980, %v977, 0
        %1131 = vmatpush.bf16.xpose.msra.mxu0 0
        %1132 = vmatpush.bf16.xpose.msra.mxu0 0
        %1133 = vmatpush.bf16.xpose.msra.mxu0 0
        %1134 = vmatpush.bf16.xpose.msra.mxu0 0
        %1135 = vmatpush.bf16.xpose.msra.mxu0 0
        %1136 = vmatpush.bf16.xpose.msra.mxu0 0
        %1137 = vmatpush.bf16.xpose.msra.mxu0 0
        %1138 = vmatpush.bf16.xpose.msra.mxu0 %v1129
        %1139 = vmatmul.bf16.gmra.mxu0 %v1126
        %v1140 = vpop.f32.mrf.mxu0
        %v1141 = vadd.f32 0.0, %v1140
        %v1142 = vpop.f32.mrf.mxu0
        %1143 = vdwg.mxu0
        %v1145 = vsel %vm980, %v1104, 0
        %v1148 = vsel %vm980, %v978, 0
        %1150 = vmatpush.bf16.xpose.msra.mxu0 0
        %1151 = vmatpush.bf16.xpose.msra.mxu0 0
        %1152 = vmatpush.bf16.xpose.msra.mxu0 0
        %1153 = vmatpush.bf16.xpose.msra.mxu0 0
        %1154 = vmatpush.bf16.xpose.msra.mxu0 0
        %1155 = vmatpush.bf16.xpose.msra.mxu0 0
        %1156 = vmatpush.bf16.xpose.msra.mxu0 0
        %1157 = vmatpush.bf16.xpose.msra.mxu0 %v1148
        %1158 = vmatmul.bf16.gmra.mxu0 %v1145
        %v1159 = vpop.f32.mrf.mxu0
        %v1160 = vadd.f32 0.0, %v1159
        %v1161 = vpop.f32.mrf.mxu0
        %1162 = vdwg.mxu0
        %v1164 = vsel %vm980, %v1105, 0
        %v1167 = vsel %vm980, %v979, 0
        %1169 = vmatpush.bf16.xpose.msra.mxu0 0
        %1170 = vmatpush.bf16.xpose.msra.mxu0 0
        %1171 = vmatpush.bf16.xpose.msra.mxu0 0
        %1172 = vmatpush.bf16.xpose.msra.mxu0 0
        %1173 = vmatpush.bf16.xpose.msra.mxu0 0
        %1174 = vmatpush.bf16.xpose.msra.mxu0 0
        %1175 = vmatpush.bf16.xpose.msra.mxu0 0
        %1176 = vmatpush.bf16.xpose.msra.mxu0 %v1167
        %1177 = vmatmul.bf16.gmra.mxu0 %v1164
        %v1178 = vpop.f32.mrf.mxu0
        %v1179 = vadd.f32 0.0, %v1178
        %v1180 = vpop.f32.mrf.mxu0
        %1181 = vdwg.mxu0
        %v1182 = vpack.c.bf16 %v1122, %v1122
        %v1183 = vpack.c.bf16 %v1141, %v1141
        %v1184 = vpack.c.bf16 %v1160, %v1160
        %v1185 = vpack.c.bf16 %v1179, %v1179
        %v1187 = vsel %vm980, %v1182, 0
        %v1190 = vsel %vm984, %v964, 0
        %1192 = vmatpush.bf16.msra.mxu0 0
        %1193 = vmatpush.bf16.msra.mxu0 0
        %1194 = vmatpush.bf16.msra.mxu0 0
        %1195 = vmatpush.bf16.msra.mxu0 0
        %1196 = vmatpush.bf16.msra.mxu0 0
        %1197 = vmatpush.bf16.msra.mxu0 0
        %1198 = vmatpush.bf16.msra.mxu0 0
        %1199 = vmatpush.bf16.msra.mxu0 %v1190
        %1200 = vmatmul.bf16.gmra.mxu0 %v1187
        %v1201 = vpop.f32.mrf.mxu0
        %v1202 = vadd.f32 0.0, %v1201
        %v1203 = vpop.f32.mrf.mxu0
        %1204 = vdwg.mxu0
        %v1206 = vsel %vm980, %v1183, 0
        %v1209 = vsel %vm984, %v965, 0
        %1211 = vmatpush.bf16.msra.mxu0 0
        %1212 = vmatpush.bf16.msra.mxu0 0
        %1213 = vmatpush.bf16.msra.mxu0 0
        %1214 = vmatpush.bf16.msra.mxu0 0
        %1215 = vmatpush.bf16.msra.mxu0 0
        %1216 = vmatpush.bf16.msra.mxu0 0
        %1217 = vmatpush.bf16.msra.mxu0 0
        %1218 = vmatpush.bf16.msra.mxu0 %v1209
        %1219 = vmatmul.bf16.gmra.mxu0 %v1206
        %v1220 = vpop.f32.mrf.mxu0
        %v1221 = vadd.f32 0.0, %v1220
        %v1222 = vpop.f32.mrf.mxu0
        %1223 = vdwg.mxu0
        %v1225 = vsel %vm980, %v1184, 0
        %v1228 = vsel %vm984, %v966, 0
        %1230 = vmatpush.bf16.msra.mxu0 0
        %1231 = vmatpush.bf16.msra.mxu0 0
        %1232 = vmatpush.bf16.msra.mxu0 0
        %1233 = vmatpush.bf16.msra.mxu0 0
        %1234 = vmatpush.bf16.msra.mxu0 0
        %1235 = vmatpush.bf16.msra.mxu0 0
        %1236 = vmatpush.bf16.msra.mxu0 0
        %1237 = vmatpush.bf16.msra.mxu0 %v1228
        %1238 = vmatmul.bf16.gmra.mxu0 %v1225
        %v1239 = vpop.f32.mrf.mxu0
        %v1240 = vadd.f32 0.0, %v1239
        %v1241 = vpop.f32.mrf.mxu0
        %1242 = vdwg.mxu0
        %v1244 = vsel %vm980, %v1185, 0
        %v1247 = vsel %vm984, %v967, 0
        %1249 = vmatpush.bf16.msra.mxu0 0
        %1250 = vmatpush.bf16.msra.mxu0 0
        %1251 = vmatpush.bf16.msra.mxu0 0
        %1252 = vmatpush.bf16.msra.mxu0 0
        %1253 = vmatpush.bf16.msra.mxu0 0
        %1254 = vmatpush.bf16.msra.mxu0 0
        %1255 = vmatpush.bf16.msra.mxu0 0
        %1256 = vmatpush.bf16.msra.mxu0 %v1247
        %1257 = vmatmul.bf16.gmra.mxu0 %v1244
        %v1258 = vpop.f32.mrf.mxu0
        %v1259 = vadd.f32 0.0, %v1258
        %v1260 = vpop.f32.mrf.mxu0
        %1261 = vdwg.mxu0
        %v1262 = vsel %vm704, %v1202, 0.0
        %v1263 = vsel %vm704, %v1221, 0.0
        %v1264 = vadd.f32 %v1262, %v1263
        %v1265 = vsel %vm704, %v1240, 0.0
        %v1266 = vadd.f32 %v1264, %v1265
        %v1267 = vsel %vm704, %v1259, 0.0
        %v1268 = vadd.f32 %v1266, %v1267
        %v1269 = vpack.c.bf16 %v853, %v853
        %v1270 = vpack.c.bf16 %v885, %v885
        %v1271 = vpack.c.bf16 %v917, %v917
        %v1272 = vpack.c.bf16 %v949, %v949
        %v1274 = vunpack.c.l.b16 %v972
        %v1275 = vpack.c.b16 %v1274, %v1274
        %1276 = vrot.lane.b32.xlu0 %v1275, 120
        %v1277 = vpop.permute.xlu0 %1276
        %v1279 = vsel %vm980, %v1269, 0
        %v1282 = vsel %vm984, %v1277, 0
        %1284 = vmatpush.bf16.msra.mxu0 0
        %1285 = vmatpush.bf16.msra.mxu0 0
        %1286 = vmatpush.bf16.msra.mxu0 0
        %1287 = vmatpush.bf16.msra.mxu0 0
        %1288 = vmatpush.bf16.msra.mxu0 0
        %1289 = vmatpush.bf16.msra.mxu0 0
        %1290 = vmatpush.bf16.msra.mxu0 0
        %1291 = vmatpush.bf16.msra.mxu0 %v1282
        %1292 = vmatmul.bf16.gmra.mxu0 %v1279
        %v1293 = vpop.f32.mrf.mxu0
        %v1294 = vadd.f32 %v701, %v1293
        %v1295 = vpop.f32.mrf.mxu0
        %1296 = vdwg.mxu0
        %v1298 = vunpack.c.l.b16 %v973
        %v1299 = vpack.c.b16 %v1298, %v1298
        %1300 = vrot.lane.b32.xlu0 %v1299, 120
        %v1301 = vpop.permute.xlu0 %1300
        %v1303 = vsel %vm980, %v1270, 0
        %v1306 = vsel %vm984, %v1301, 0
        %1308 = vmatpush.bf16.msra.mxu0 0
        %1309 = vmatpush.bf16.msra.mxu0 0
        %1310 = vmatpush.bf16.msra.mxu0 0
        %1311 = vmatpush.bf16.msra.mxu0 0
        %1312 = vmatpush.bf16.msra.mxu0 0
        %1313 = vmatpush.bf16.msra.mxu0 0
        %1314 = vmatpush.bf16.msra.mxu0 0
        %1315 = vmatpush.bf16.msra.mxu0 %v1306
        %1316 = vmatmul.bf16.gmra.mxu0 %v1303
        %v1317 = vpop.f32.mrf.mxu0
        %v1318 = vadd.f32 %v701, %v1317
        %v1319 = vpop.f32.mrf.mxu0
        %1320 = vdwg.mxu0
        %v1322 = vunpack.c.l.b16 %v974
        %v1323 = vpack.c.b16 %v1322, %v1322
        %1324 = vrot.lane.b32.xlu0 %v1323, 120
        %v1325 = vpop.permute.xlu0 %1324
        %v1327 = vsel %vm980, %v1271, 0
        %v1330 = vsel %vm984, %v1325, 0
        %1332 = vmatpush.bf16.msra.mxu0 0
        %1333 = vmatpush.bf16.msra.mxu0 0
        %1334 = vmatpush.bf16.msra.mxu0 0
        %1335 = vmatpush.bf16.msra.mxu0 0
        %1336 = vmatpush.bf16.msra.mxu0 0
        %1337 = vmatpush.bf16.msra.mxu0 0
        %1338 = vmatpush.bf16.msra.mxu0 0
        %1339 = vmatpush.bf16.msra.mxu0 %v1330
        %1340 = vmatmul.bf16.gmra.mxu0 %v1327
        %v1341 = vpop.f32.mrf.mxu0
        %v1342 = vadd.f32 %v701, %v1341
        %v1343 = vpop.f32.mrf.mxu0
        %1344 = vdwg.mxu0
        %v1346 = vunpack.c.l.b16 %v975
        %v1347 = vpack.c.b16 %v1346, %v1346
        %1348 = vrot.lane.b32.xlu0 %v1347, 120
        %v1349 = vpop.permute.xlu0 %1348
        %v1351 = vsel %vm980, %v1272, 0
        %v1354 = vsel %vm984, %v1349, 0
        %1356 = vmatpush.bf16.msra.mxu0 0
        %1357 = vmatpush.bf16.msra.mxu0 0
        %1358 = vmatpush.bf16.msra.mxu0 0
        %1359 = vmatpush.bf16.msra.mxu0 0
        %1360 = vmatpush.bf16.msra.mxu0 0
        %1361 = vmatpush.bf16.msra.mxu0 0
        %1362 = vmatpush.bf16.msra.mxu0 0
        %1363 = vmatpush.bf16.msra.mxu0 %v1354
        %1364 = vmatmul.bf16.gmra.mxu0 %v1351
        %v1365 = vpop.f32.mrf.mxu0
        %v1366 = vadd.f32 %v701, %v1365
        %v1367 = vpop.f32.mrf.mxu0
        %1368 = vdwg.mxu0
        %v1369 = vsel %vm980, %v1294, -inf
        %1370 = vmax.xlane.f32.xlu0 %v1369
        %v1371 = vpop.xlane.xlu0 %1370
        %v1372 = vsel %vm980, %v1318, -inf
        %1373 = vmax.xlane.f32.xlu0 %v1372
        %v1374 = vpop.xlane.xlu0 %1373
        %v1375 = vsel %vm980, %v1342, -inf
        %1376 = vmax.xlane.f32.xlu0 %v1375
        %v1377 = vpop.xlane.xlu0 %1376
        %v1378 = vsel %vm980, %v1366, -inf
        %1379 = vmax.xlane.f32.xlu0 %v1378
        %v1380 = vpop.xlane.xlu0 %1379
        %v1381 = vsub.f32 %v1294, %v1371
        %v1382 = vsub.f32 %v1318, %v1374
        %v1383 = vsub.f32 %v1342, %v1377
        %v1384 = vsub.f32 %v1366, %v1380
        %v1385 = vmul.f32 %v1381, 1.442695
        %v1386 = vpow.pop %v1385
        %v1387 = vmul.f32 %v1382, 1.442695
        %v1388 = vpow.pop %v1387
        %v1389 = vmul.f32 %v1383, 1.442695
        %v1390 = vpow.pop %v1389
        %v1391 = vmul.f32 %v1384, 1.442695
        %v1392 = vpow.pop %v1391
        %v1393 = vsel %vm980, %v1386, 0.0
        %1394 = vadd.xlane.f32.xlu0 %v1393
        %v1395 = vpop.xlane.xlu0 %1394
        %v1396 = vsel %vm980, %v1388, 0.0
        %1397 = vadd.xlane.f32.xlu0 %v1396
        %v1398 = vpop.xlane.xlu0 %1397
        %v1399 = vsel %vm980, %v1390, 0.0
        %1400 = vadd.xlane.f32.xlu0 %v1399
        %v1401 = vpop.xlane.xlu0 %1400
        %v1402 = vsel %vm980, %v1392, 0.0
        %1403 = vadd.xlane.f32.xlu0 %v1402
        %v1404 = vpop.xlane.xlu0 %1403
        %v1405 = vrcp.pop %v1395
        %v1406 = vrcp.pop %v1398
        %v1407 = vrcp.pop %v1401
        %v1408 = vrcp.pop %v1404
        %v1409 = vmul.f32 %v1386, %v1405
        %v1410 = vmul.f32 %v1388, %v1406
        %v1411 = vmul.f32 %v1390, %v1407
        %v1412 = vmul.f32 %v1392, %v1408
        %v1413 = vpack.c.bf16 %v1409, %v1409
        %v1414 = vpack.c.bf16 %v1410, %v1410
        %v1415 = vpack.c.bf16 %v1411, %v1411
        %v1416 = vpack.c.bf16 %v1412, %v1412
        %v1418 = vunpack.c.l.b16 %v976
        %v1419 = vpack.c.b16 %v1418, %v1418
        %1420 = vrot.lane.b32.xlu0 %v1419, 120
        %v1421 = vpop.permute.xlu0 %1420
        %v1423 = vsel %vm980, %v1413, 0
        %v1426 = vsel %vm980, %v1421, 0
        %1428 = vmatpush.bf16.xpose.msra.mxu0 0
        %1429 = vmatpush.bf16.xpose.msra.mxu0 0
        %1430 = vmatpush.bf16.xpose.msra.mxu0 0
        %1431 = vmatpush.bf16.xpose.msra.mxu0 0
        %1432 = vmatpush.bf16.xpose.msra.mxu0 0
        %1433 = vmatpush.bf16.xpose.msra.mxu0 0
        %1434 = vmatpush.bf16.xpose.msra.mxu0 0
        %1435 = vmatpush.bf16.xpose.msra.mxu0 %v1426
        %1436 = vmatmul.bf16.gmra.mxu0 %v1423
        %v1437 = vpop.f32.mrf.mxu0
        %v1438 = vadd.f32 0.0, %v1437
        %v1439 = vpop.f32.mrf.mxu0
        %1440 = vdwg.mxu0
        %v1442 = vunpack.c.l.b16 %v977
        %v1443 = vpack.c.b16 %v1442, %v1442
        %1444 = vrot.lane.b32.xlu0 %v1443, 120
        %v1445 = vpop.permute.xlu0 %1444
        %v1447 = vsel %vm980, %v1414, 0
        %v1450 = vsel %vm980, %v1445, 0
        %1452 = vmatpush.bf16.xpose.msra.mxu0 0
        %1453 = vmatpush.bf16.xpose.msra.mxu0 0
        %1454 = vmatpush.bf16.xpose.msra.mxu0 0
        %1455 = vmatpush.bf16.xpose.msra.mxu0 0
        %1456 = vmatpush.bf16.xpose.msra.mxu0 0
        %1457 = vmatpush.bf16.xpose.msra.mxu0 0
        %1458 = vmatpush.bf16.xpose.msra.mxu0 0
        %1459 = vmatpush.bf16.xpose.msra.mxu0 %v1450
        %1460 = vmatmul.bf16.gmra.mxu0 %v1447
        %v1461 = vpop.f32.mrf.mxu0
        %v1462 = vadd.f32 0.0, %v1461
        %v1463 = vpop.f32.mrf.mxu0
        %1464 = vdwg.mxu0
        %v1466 = vunpack.c.l.b16 %v978
        %v1467 = vpack.c.b16 %v1466, %v1466
        %1468 = vrot.lane.b32.xlu0 %v1467, 120
        %v1469 = vpop.permute.xlu0 %1468
        %v1471 = vsel %vm980, %v1415, 0
        %v1474 = vsel %vm980, %v1469, 0
        %1476 = vmatpush.bf16.xpose.msra.mxu0 0
        %1477 = vmatpush.bf16.xpose.msra.mxu0 0
        %1478 = vmatpush.bf16.xpose.msra.mxu0 0
        %1479 = vmatpush.bf16.xpose.msra.mxu0 0
        %1480 = vmatpush.bf16.xpose.msra.mxu0 0
        %1481 = vmatpush.bf16.xpose.msra.mxu0 0
        %1482 = vmatpush.bf16.xpose.msra.mxu0 0
        %1483 = vmatpush.bf16.xpose.msra.mxu0 %v1474
        %1484 = vmatmul.bf16.gmra.mxu0 %v1471
        %v1485 = vpop.f32.mrf.mxu0
        %v1486 = vadd.f32 0.0, %v1485
        %v1487 = vpop.f32.mrf.mxu0
        %1488 = vdwg.mxu0
        %v1490 = vunpack.c.l.b16 %v979
        %v1491 = vpack.c.b16 %v1490, %v1490
        %1492 = vrot.lane.b32.xlu0 %v1491, 120
        %v1493 = vpop.permute.xlu0 %1492
        %v1495 = vsel %vm980, %v1416, 0
        %v1498 = vsel %vm980, %v1493, 0
        %1500 = vmatpush.bf16.xpose.msra.mxu0 0
        %1501 = vmatpush.bf16.xpose.msra.mxu0 0
        %1502 = vmatpush.bf16.xpose.msra.mxu0 0
        %1503 = vmatpush.bf16.xpose.msra.mxu0 0
        %1504 = vmatpush.bf16.xpose.msra.mxu0 0
        %1505 = vmatpush.bf16.xpose.msra.mxu0 0
        %1506 = vmatpush.bf16.xpose.msra.mxu0 0
        %1507 = vmatpush.bf16.xpose.msra.mxu0 %v1498
        %1508 = vmatmul.bf16.gmra.mxu0 %v1495
        %v1509 = vpop.f32.mrf.mxu0
        %v1510 = vadd.f32 0.0, %v1509
        %v1511 = vpop.f32.mrf.mxu0
        %1512 = vdwg.mxu0
        %v1513 = vpack.c.bf16 %v1438, %v1438
        %v1514 = vpack.c.bf16 %v1462, %v1462
        %v1515 = vpack.c.bf16 %v1486, %v1486
        %v1516 = vpack.c.bf16 %v1510, %v1510
        %v1518 = vsel %vm980, %v1513, 0
        %1520 = vmatpush.bf16.msra.mxu0 0
        %1521 = vmatpush.bf16.msra.mxu0 0
        %1522 = vmatpush.bf16.msra.mxu0 0
        %1523 = vmatpush.bf16.msra.mxu0 0
        %1524 = vmatpush.bf16.msra.mxu0 0
        %1525 = vmatpush.bf16.msra.mxu0 0
        %1526 = vmatpush.bf16.msra.mxu0 0
        %1527 = vmatpush.bf16.msra.mxu0 %v1190
        %1528 = vmatmul.bf16.gmra.mxu0 %v1518
        %v1529 = vpop.f32.mrf.mxu0
        %v1530 = vadd.f32 0.0, %v1529
        %v1531 = vpop.f32.mrf.mxu0
        %1532 = vdwg.mxu0
        %v1534 = vsel %vm980, %v1514, 0
        %1536 = vmatpush.bf16.msra.mxu0 0
        %1537 = vmatpush.bf16.msra.mxu0 0
        %1538 = vmatpush.bf16.msra.mxu0 0
        %1539 = vmatpush.bf16.msra.mxu0 0
        %1540 = vmatpush.bf16.msra.mxu0 0
        %1541 = vmatpush.bf16.msra.mxu0 0
        %1542 = vmatpush.bf16.msra.mxu0 0
        %1543 = vmatpush.bf16.msra.mxu0 %v1209
        %1544 = vmatmul.bf16.gmra.mxu0 %v1534
        %v1545 = vpop.f32.mrf.mxu0
        %v1546 = vadd.f32 0.0, %v1545
        %v1547 = vpop.f32.mrf.mxu0
        %1548 = vdwg.mxu0
        %v1550 = vsel %vm980, %v1515, 0
        %1552 = vmatpush.bf16.msra.mxu0 0
        %1553 = vmatpush.bf16.msra.mxu0 0
        %1554 = vmatpush.bf16.msra.mxu0 0
        %1555 = vmatpush.bf16.msra.mxu0 0
        %1556 = vmatpush.bf16.msra.mxu0 0
        %1557 = vmatpush.bf16.msra.mxu0 0
        %1558 = vmatpush.bf16.msra.mxu0 0
        %1559 = vmatpush.bf16.msra.mxu0 %v1228
        %1560 = vmatmul.bf16.gmra.mxu0 %v1550
        %v1561 = vpop.f32.mrf.mxu0
        %v1562 = vadd.f32 0.0, %v1561
        %v1563 = vpop.f32.mrf.mxu0
        %1564 = vdwg.mxu0
        %v1566 = vsel %vm980, %v1516, 0
        %1568 = vmatpush.bf16.msra.mxu0 0
        %1569 = vmatpush.bf16.msra.mxu0 0
        %1570 = vmatpush.bf16.msra.mxu0 0
        %1571 = vmatpush.bf16.msra.mxu0 0
        %1572 = vmatpush.bf16.msra.mxu0 0
        %1573 = vmatpush.bf16.msra.mxu0 0
        %1574 = vmatpush.bf16.msra.mxu0 0
        %1575 = vmatpush.bf16.msra.mxu0 %v1247
        %1576 = vmatmul.bf16.gmra.mxu0 %v1566
        %v1577 = vpop.f32.mrf.mxu0
        %v1578 = vadd.f32 0.0, %v1577
        %v1579 = vpop.f32.mrf.mxu0
        %1580 = vdwg.mxu0
        %v1581 = vsel %vm704, %v1530, 0.0
        %v1582 = vsel %vm704, %v1546, 0.0
        %v1583 = vadd.f32 %v1581, %v1582
        %v1584 = vsel %vm704, %v1562, 0.0
        %v1585 = vadd.f32 %v1583, %v1584
        %v1586 = vsel %vm704, %v1578, 0.0
        %v1587 = vadd.f32 %v1585, %v1586
        %v1588 = vld [vmem:[%s664] sm:$0x1]
        %v1590 = vperm.slane %v1588, 0
        %v1592 = vadd.f32 %v1268, %v1590
        %v1593 = vadd.f32 %v1587, %v1590
        %v1594 = vadd.f32 %v698, %v1592
        %v1595 = vadd.f32 %v699, %v1593
        %v1596 = vld [vmem:[%s667] sm:$0x1]
        %v1597 = vld [vmem:[%s670] sm:$0x1]
        %v1598 = vsel %vm704, %v1594, 0.0
        %1599 = vadd.xlane.f32.xlu0 %v1598
        %v1600 = vpop.xlane.xlu0 %1599
        %v1601 = vsel %vm704, %v1595, 0.0
        %1602 = vadd.xlane.f32.xlu0 %v1601
        %v1603 = vpop.xlane.xlu0 %1602
        %v1604 = vmul.f32 %v1600, %v717
        %v1605 = vmul.f32 %v1603, %v717
        %v1606 = vsub.f32 %v1594, %v1604
        %v1607 = vsub.f32 %v1595, %v1605
        %v1608 = vmul.f32 %v1606, %v1606
        %v1609 = vmul.f32 %v1607, %v1607
        %v1610 = vsel %vm704, %v1608, 0.0
        %1611 = vadd.xlane.f32.xlu0 %v1610
        %v1612 = vpop.xlane.xlu0 %1611
        %v1613 = vsel %vm704, %v1609, 0.0
        %1614 = vadd.xlane.f32.xlu0 %v1613
        %v1615 = vpop.xlane.xlu0 %1614
        %v1616 = vmul.f32 %v1612, %v717
        %v1617 = vmul.f32 %v1615, %v717
        %v1618 = vadd.f32 %v1616, 1e-05
        %v1619 = vadd.f32 %v1617, 1e-05
        %v1620 = vrsqrt.pop %v1618
        %v1621 = vmul.f32 %v1620, %v1618
        %v1622 = vmul.f32 %v1621, %v1620
        %v1623 = vmul.f32 0.5, %v1622
        %v1624 = vsub.f32 1.5, %v1623
        %v1625 = vmul.f32 %v1620, %v1624
        %vm1626 = vweird.f32 %v1618
        %vm1627 = vweird.f32 %v1620
        %vm1628 = vmor %vm1626, %vm1627
        %v1629 = vsel %vm1628, %v1620, %v1625
        %v1630 = vrsqrt.pop %v1619
        %v1631 = vmul.f32 %v1630, %v1619
        %v1632 = vmul.f32 %v1631, %v1630
        %v1633 = vmul.f32 0.5, %v1632
        %v1634 = vsub.f32 1.5, %v1633
        %v1635 = vmul.f32 %v1630, %v1634
        %vm1636 = vweird.f32 %v1619
        %vm1637 = vweird.f32 %v1630
        %vm1638 = vmor %vm1636, %vm1637
        %v1639 = vsel %vm1638, %v1630, %v1635
        %v1640 = vmul.f32 %v1606, %v1629
        %v1641 = vmul.f32 %v1607, %v1639
        %v1643 = vperm.slane %v1596, 0
        %v1645 = vmul.f32 %v1640, %v1643
        %v1646 = vmul.f32 %v1641, %v1643
        %v1648 = vperm.slane %v1597, 0
        %v1650 = vadd.f32 %v1645, %v1648
        %v1651 = vadd.f32 %v1646, %v1648
        %v1652 = vpack.c.bf16 %v1651, %v1650
        %v1653 = vld [vmem:[%s675] sm:$0xf]
        %v1654 = vld [vmem:[%s675 + $0x4] sm:$0xf]
        %v1655 = vld [vmem:[%s675 + $0x8] sm:$0xf]
        %v1656 = vld [vmem:[%s675 + $0xc] sm:$0xf]
        %v1657 = vld [vmem:[%s678] sm:$0x1]
        %v1659 = vperm.slane %v1657, 0
        %v1665 = vunpack.c.l.b16 %v1653
        %v1666 = vunpack.c.l.b16 %v1654
        %v1667 = vunpack.c.l.b16 %v1655
        %v1668 = vunpack.c.l.b16 %v1656
        %v1669 = vpack.c.b16 %v1666, %v1665
        %v1670 = vpack.c.b16 %v1668, %v1667
        %v1674 = vsel %vm704, %v1652, 0
        %1676 = vmatpush.bf16.msra.mxu0 0
        %1677 = vmatpush.bf16.msra.mxu0 0
        %1678 = vmatpush.bf16.msra.mxu0 0
        %1679 = vmatpush.bf16.msra.mxu0 0
        %1680 = vmatpush.bf16.msra.mxu0 0
        %1681 = vmatpush.bf16.msra.mxu0 0
        %1682 = vmatpush.bf16.msra.mxu0 %v1670
        %1683 = vmatpush.bf16.msra.mxu0 %v1669
        %1684 = vmatmul.bf16.gmra.mxu0 %v1674
        %v1685 = vpop.f32.mrf.mxu0
        %v1686 = vadd.f32 %v1659, %v1685
        %v1687 = vpop.f32.mrf.mxu0
        %v1688 = vadd.f32 %v1659, %v1687
        %1689 = vdwg.mxu0
        %v1690 = vmul.f32 %v1686, 1.702
        %v1691 = vmul.f32 %v1688, 1.702
        %v1692 = vxor.u32 %v1690, 2147483648
        %v1693 = vxor.u32 %v1691, 2147483648
        %v1694 = vmul.f32 %v1692, 1.442695
        %v1695 = vpow.pop %v1694
        %v1696 = vmul.f32 %v1693, 1.442695
        %v1697 = vpow.pop %v1696
        %v1698 = vadd.f32 %v1695, 1.0
        %v1699 = vadd.f32 %v1697, 1.0
        %v1700 = vrcp.pop %v1698
        %v1701 = vmul.f32 %v1698, %v1700
        %v1702 = vsub.f32 1.0, %v1701
        %v1703 = vmul.f32 %v1700, %v1702
        %v1704 = vadd.f32 %v1700, %v1703
        %vm1705 = vweird.f32 %v1698
        %vm1706 = vweird.f32 %v1700
        %vm1707 = vmor %vm1705, %vm1706
        %v1708 = vsel %vm1707, %v1700, %v1704
        %v1709 = vand.u32 2147483647, %v1698
        %vm1710 = vcmp.eq.f32.partialorder %v1709, 8.507059e+37
        %v1711 = vand.u32 %v1698, 2147483648
        %v1712 = vor.u32 1.1754944e-38, %v1711
        %v1713 = vsel %vm1710, %v1712, %v1708
        %v1714 = vmul.f32 1.0, %v1713
        %v1715 = vrcp.pop %v1699
        %v1716 = vmul.f32 %v1699, %v1715
        %v1717 = vsub.f32 1.0, %v1716
        %v1718 = vmul.f32 %v1715, %v1717
        %v1719 = vadd.f32 %v1715, %v1718
        %vm1720 = vweird.f32 %v1699
        %vm1721 = vweird.f32 %v1715
        %vm1722 = vmor %vm1720, %vm1721
        %v1723 = vsel %vm1722, %v1715, %v1719
        %v1724 = vand.u32 2147483647, %v1699
        %vm1725 = vcmp.eq.f32.partialorder %v1724, 8.507059e+37
        %v1726 = vand.u32 %v1699, 2147483648
        %v1727 = vor.u32 1.1754944e-38, %v1726
        %v1728 = vsel %vm1725, %v1727, %v1723
        %v1729 = vmul.f32 1.0, %v1728
        %v1730 = vmul.f32 %v1686, %v1714
        %v1731 = vmul.f32 %v1688, %v1729
        %v1732 = vpack.c.bf16 %v1731, %v1730
        %v1733 = vld [vmem:[%s683] sm:$0xf]
        %v1734 = vld [vmem:[%s683 + $0x4] sm:$0xf]
        %v1735 = vld [vmem:[%s683 + $0x8] sm:$0xf]
        %v1736 = vld [vmem:[%s683 + $0xc] sm:$0xf]
        %v1737 = vld [vmem:[%s683 + $0x10] sm:$0xf]
        %v1738 = vld [vmem:[%s683 + $0x14] sm:$0xf]
        %v1739 = vld [vmem:[%s683 + $0x18] sm:$0xf]
        %v1740 = vld [vmem:[%s683 + $0x1c] sm:$0xf]
        %v1741 = vld [vmem:[%s683 + $0x20] sm:$0xf]
        %v1742 = vld [vmem:[%s683 + $0x24] sm:$0xf]
        %v1743 = vld [vmem:[%s683 + $0x28] sm:$0xf]
        %v1744 = vld [vmem:[%s683 + $0x2c] sm:$0xf]
        %v1745 = vld [vmem:[%s683 + $0x30] sm:$0xf]
        %v1746 = vld [vmem:[%s683 + $0x34] sm:$0xf]
        %v1747 = vld [vmem:[%s683 + $0x38] sm:$0xf]
        %v1748 = vld [vmem:[%s683 + $0x3c] sm:$0xf]
        %v1749 = vld [vmem:[%s686] sm:$0x1]
        %v1751 = vperm.slane %v1749, 0
        %v1769 = vunpack.c.l.b16 %v1733
        %v1770 = vunpack.c.l.b16 %v1734
        %v1771 = vunpack.c.l.b16 %v1735
        %v1772 = vunpack.c.l.b16 %v1736
        %v1773 = vunpack.c.l.b16 %v1737
        %v1774 = vunpack.c.l.b16 %v1738
        %v1775 = vunpack.c.l.b16 %v1739
        %v1776 = vunpack.c.l.b16 %v1740
        %v1777 = vunpack.c.l.b16 %v1741
        %v1778 = vunpack.c.l.b16 %v1742
        %v1779 = vunpack.c.l.b16 %v1743
        %v1780 = vunpack.c.l.b16 %v1744
        %v1781 = vunpack.c.l.b16 %v1745
        %v1782 = vunpack.c.l.b16 %v1746
        %v1783 = vunpack.c.l.b16 %v1747
        %v1784 = vunpack.c.l.b16 %v1748
        %v1785 = vpack.c.b16 %v1770, %v1769
        %v1786 = vpack.c.b16 %v1772, %v1771
        %v1787 = vpack.c.b16 %v1774, %v1773
        %v1788 = vpack.c.b16 %v1776, %v1775
        %v1789 = vpack.c.b16 %v1778, %v1777
        %v1790 = vpack.c.b16 %v1780, %v1779
        %v1791 = vpack.c.b16 %v1782, %v1781
        %v1792 = vpack.c.b16 %v1784, %v1783
        %1801 = vmatpush.bf16.msra.mxu0 %v1792
        %1802 = vmatpush.bf16.msra.mxu0 %v1791
        %1803 = vmatpush.bf16.msra.mxu0 %v1790
        %1804 = vmatpush.bf16.msra.mxu0 %v1789
        %1805 = vmatpush.bf16.msra.mxu0 %v1788
        %1806 = vmatpush.bf16.msra.mxu0 %v1787
        %1807 = vmatpush.bf16.msra.mxu0 %v1786
        %1808 = vmatpush.bf16.msra.mxu0 %v1785
        %1809 = vmatmul.bf16.gmra.mxu0 %v1732
        %v1810 = vpop.f32.mrf.mxu0
        %v1811 = vadd.f32 %v1751, %v1810
        %v1812 = vpop.f32.mrf.mxu0
        %v1813 = vadd.f32 %v1751, %v1812
        %1814 = vdwg.mxu0
        %v1815 = vadd.f32 %v1594, %v1811
        %v1816 = vadd.f32 %v1595, %v1813
        %1817 = vst.msk [vmem:[#allocation2] sm:$0xff] %vm704, %v1815
        %1818 = vst.msk [vmem:[#allocation2 + $0x8] sm:$0xff] %vm704, %v1816
        // Predicated region
        $region81: #{tpu_custom_call.1} parent=75 // pred_check
          %p1819 = pneg %p420
        $region82: #{tpu_custom_call.1} parent=75 // pred_check_branch
          %1821 = sbr.rel (%p1819) target = $region84
        $region83: #{tpu_custom_call.1} parent=75 // pred_region
          %s1822 = smul.u32 2, %s30
          %1824 = vsyncadd [#allocation3], 0
          %s1825 = smul.addr %s1822, 8
          %s1826 = scalar_lea.hbm %s14, %s1825
          %s1827 = sshll.u32 [#allocation2], 4
          %s1828 = int_to_ptr.vmem [resolvable:$true] %s1827
          %s1829 = sshll.u32 %s1826, 4
          %s1830 = int_to_ptr.hbm [resolvable:$true] %s1829
          %1835 = dma.vmem_to_hbm [thread:$0]  %s1828, 256, %s1830, [#allocation3], 128, 128, 8
        $region84: #{tpu_custom_call.1} parent=75 // pred_fallthru
          _
        // Predicated region
        $region85: #{tpu_custom_call.1} parent=75 // pred_check
          %p1836 = pneg %p420
        $region86: #{tpu_custom_call.1} parent=75 // pred_check_branch
          %1838 = sbr.rel (%p1836) target = $region88
        $region87: #{tpu_custom_call.1} parent=75 // pred_region
          %1840 = dma.done [#allocation3], 256
        $region88: #{tpu_custom_call.1} parent=75 // pred_fallthru
          _
      $region76: #{tpu_custom_call.1} parent=5 // pred_fallthru
        _
      %p1841 = scmp.le.s32.totalorder 2, %s21
      // Predicated region
      $region89: #{tpu_custom_call.1} parent=5 // pred_check
        %p1842 = pneg %p1841
      $region90: #{tpu_custom_call.1} parent=5 // pred_check_branch
        %1844 = sbr.rel (%p1842) target = $region92
      $region91: #{tpu_custom_call.1} parent=5 // pred_region
        %s1845 = ssub.s32 %s21, 2
      $region92: #{tpu_custom_call.1} parent=5 // pred_fallthru
        _
    $region6: #{tpu_custom_call.1} parent=1 // loop_footer
      %s25 = sadd.s32 1, %s21
    $region7: #{tpu_custom_call.1} parent=1 // loop_footer_branch
      %20 = sbr.rel target = $region3
    $region8: #{tpu_custom_call.1} parent=1 // loop_exit
      _
    %1846 = vsyncpa [#allocation3], 1
    %s1847 = scalar_lea.sflag [#allocation3], 1
    %1848 = vsyncpa %s1847, 1

</llo_original>
